<compile_context>
chip_gen: v6e
topology: v6e:2x2x1
jax: 0.10.0
libtpu: 0.0.40
codegen_flags: <defaults>
</compile_context>

<pallas_src>
import functools

import jax
import jax.numpy as jnp
import numpy as np
from jax import lax
from jax.experimental import pallas as pl
from jax.experimental.pallas import tpu as pltpu

BN_EPS = 1e-5


# ----------------------------------------------------------------------------
# In-kernel helpers
# ----------------------------------------------------------------------------
def _shift_taps(feat, k, H, W, fill):
    """k*k spatially shifted copies of a channels-first feature map.

    feat: (C, H*W) value, flattened spatial axis on lanes.
    Tap t = (dy, dx) holds feat[c, y+dy-p, x+dx-p] with `fill` outside the
    image (p = (k-1)//2).  Built from static lane slices of a lane-padded
    copy plus an x-bound mask: row wrap-around is masked, top/bottom overflow
    lands in the fill padding, so no per-tap reshape relayout and no roll.
    """
    C, HW = feat.shape
    p = (k - 1) // 2
    pad = p * W + p                                          # max |flat offset|
    fill_blk = jnp.full((C, pad), fill, feat.dtype)
    fp = jnp.concatenate([fill_blk, feat, fill_blk], axis=1)  # (C, HW + 2*pad)
    xpix = lax.broadcasted_iota(jnp.int32, (1, HW), 1) % W    # x position per lane
    taps = []
    for t in range(k * k):
        dy, dx = divmod(t, k)
        ddy, ddx = dy - p, dx - p
        if ddy == 0 and ddx == 0:
            taps.append(feat)                                 # center tap = identity
            continue
        off = ddy * W + ddx
        sl = fp[:, pad + off:pad + off + HW]                  # static lane slice
        valid = (xpix + ddx >= 0) & (xpix + ddx < W)          # row-wrap guard
        taps.append(jnp.where(valid, sl, fill))
    return taps


def _inception_kernel(x_ref, wcat_ref, bcat_ref, w3_ref, b3_ref,
                      w5_ref, b5_ref, w4_ref, b4_ref, o_ref,
                      *, H, W, c1, c2, c3, n1, n2, n3, k3, k5):
    """One image per grid step.

    x_ref: (C_in, H*W)    channels-first flattened input tile
    o_ref: (C_total, H*W) concatenated (NCHW-layout) output slab
    Weights are BN-folded, channels-out major:
      wcat (c1+c2+c3, C_in), w3 (n2, k3*k3*c2), w5 (n3, k5*k5*c3), w4 (n4, C_in)
    """
    x = x_ref[...]

    # ---- fused 1x1 stage: branch1 + 3x3-reduce + 5x5-reduce share x --------
    ycat = jnp.dot(wcat_ref[...], x, preferred_element_type=jnp.float32)
    ycat = jnp.maximum(ycat + bcat_ref[...], 0.0)
    o_ref[0:n1, :] = ycat[0:c1, :]                            # branch1 slab
    y2a = ycat[c1:c1 + c2, :]
    y3a = ycat[c1 + c2:c1 + c2 + c3, :]

    # ---- branch2: 3x3 conv as one wide-K implicit-GEMM dot -----------------
    col3 = jnp.concatenate(_shift_taps(y2a, k3, H, W, 0.0), axis=0)
    y2 = jnp.dot(w3_ref[...], col3, preferred_element_type=jnp.float32)
    o_ref[n1:n1 + n2, :] = jnp.maximum(y2 + b3_ref[...], 0.0)

    # ---- branch3: 5x5 conv --------------------------------------------------
    col5 = jnp.concatenate(_shift_taps(y3a, k5, H, W, 0.0), axis=0)
    y3 = jnp.dot(w5_ref[...], col5, preferred_element_type=jnp.float32)
    o_ref[n1 + n2:n1 + n2 + n3, :] = jnp.maximum(y3 + b5_ref[...], 0.0)

    # ---- branch4: 3x3/s1/p1 max-pool (shifted taps, -inf fill) + 1x1 conv ---
    pooled = functools.reduce(jnp.maximum, _shift_taps(x, 3, H, W, -jnp.inf))
    y4 = jnp.dot(w4_ref[...], pooled, preferred_element_type=jnp.float32)
    o_ref[n1 + n2 + n3:, :] = jnp.maximum(y4 + b4_ref[...], 0.0)


# ----------------------------------------------------------------------------
# Parameter init + BN folding (host / XLA glue)
# ----------------------------------------------------------------------------
def init_conv_block(key, c_in, c_out, k):
    """Deterministic parameters matching conv_block: Conv2d + BatchNorm2d(eval)."""
    ks = jax.random.split(key, 6)
    fan_in = c_in * k * k
    bound = 1.0 / np.sqrt(fan_in)
    return {
        # Torch layout (Cout, Cin, kH, kW); k is recovered from the shape.
        "w": jax.random.uniform(ks[0], (c_out, c_in, k, k), jnp.float32,
                                -bound, bound),
        "b": jax.random.uniform(ks[1], (c_out,), jnp.float32, -bound, bound),
        "gamma": jax.random.uniform(ks[2], (c_out,), jnp.float32, 0.5, 1.5),
        "beta": jax.random.uniform(ks[3], (c_out,), jnp.float32, -0.5, 0.5),
        "mean": jax.random.normal(ks[4], (c_out,), jnp.float32) * 0.1,
        "var": jax.random.uniform(ks[5], (c_out,), jnp.float32, 0.5, 1.5),
    }


def _bn_scale_bias(params):
    scale = params["gamma"] / jnp.sqrt(params["var"] + BN_EPS)        # (Cout,)
    bias = (params["b"] - params["mean"]) * scale + params["beta"]    # (Cout,)
    return scale, bias


def fold_bn_1x1(params):
    """-> (w (C_out, C_in), bias (C_out, 1)) with conv bias + BN folded."""
    c_out, c_in, _, _ = params["w"].shape
    scale, bias = _bn_scale_bias(params)
    w_mat = params["w"].reshape(c_out, c_in) * scale[:, None]
    return w_mat, bias.reshape(c_out, 1)


def fold_bn_kxk(params):
    """-> (w (C_out, k*k*C_in), bias (C_out, 1), k); column block t = tap (dy,dx)."""
    c_out, c_in, k, _ = params["w"].shape
    scale, bias = _bn_scale_bias(params)
    # (Cout,Cin,kH,kW) -> (Cout,kH,kW,Cin) -> (Cout, k*k*Cin); col = t*Cin + c
    w_flat = jnp.transpose(params["w"], (0, 2, 3, 1)).reshape(c_out, k * k * c_in)
    return w_flat * scale[:, None], bias.reshape(c_out, 1), k


# ----------------------------------------------------------------------------
# Inception module
# ----------------------------------------------------------------------------
def init_inception(key, in_ch, out_1_1, red_3_3, out_3_3, red_5_5, out_5_5,
                   out_1_1pool):
    ks = jax.random.split(key, 6)
    return {
        "b1": init_conv_block(ks[0], in_ch, out_1_1, 1),
        "b2a": init_conv_block(ks[1], in_ch, red_3_3, 1),
        "b2b": init_conv_block(ks[2], red_3_3, out_3_3, 3),
        "b3a": init_conv_block(ks[3], in_ch, red_5_5, 1),
        "b3b": init_conv_block(ks[4], red_5_5, out_5_5, 5),
        "b4": init_conv_block(ks[5], in_ch, out_1_1pool, 1),
    }


@jax.jit
def inception_forward(params, x_nchw):
    n, c_in, h, w = x_nchw.shape
    hw = h * w
    x_flat = x_nchw.reshape(n, c_in, hw)                 # NCHW, spatial flattened

    # BN folding + weight concat for the shared 1x1 stage (all host-side, tiny).
    w1, b1 = fold_bn_1x1(params["b1"])
    w2a, b2a = fold_bn_1x1(params["b2a"])
    w3a, b3a = fold_bn_1x1(params["b3a"])
    wcat = jnp.concatenate([w1, w2a, w3a], axis=0)       # (c1+c2+c3, C_in)
    bcat = jnp.concatenate([b1, b2a, b3a], axis=0)       # (c1+c2+c3, 1)

    w3, b3, k3 = fold_bn_kxk(params["b2b"])
    w5, b5, k5 = fold_bn_kxk(params["b3b"])
    w4, b4 = fold_bn_1x1(params["b4"])

    c1, c2, c3 = w1.shape[0], w2a.shape[0], w3a.shape[0]
    n1, n2, n3, n4 = c1, w3.shape[0], w5.shape[0], w4.shape[0]
    c_total = n1 + n2 + n3 + n4

    kern = functools.partial(_inception_kernel, H=h, W=w, c1=c1, c2=c2, c3=c3,
                             n1=n1, n2=n2, n3=n3, k3=k3, k5=k5)

    def full_spec(shape):
        return pl.BlockSpec(shape, lambda i, _s=len(shape): (0,) * _s)

    out = pl.pallas_call(
        kern,
        out_shape=jax.ShapeDtypeStruct((n, c_total, hw), jnp.float32),
        grid_spec=pltpu.PrefetchScalarGridSpec(
            num_scalar_prefetch=0,
            grid=(n,),
            in_specs=[
                pl.BlockSpec((None, c_in, hw), lambda i: (i, 0, 0)),
                full_spec(wcat.shape), full_spec(bcat.shape),
                full_spec(w3.shape), full_spec(b3.shape),
                full_spec(w5.shape), full_spec(b5.shape),
                full_spec(w4.shape), full_spec(b4.shape),
            ],
            out_specs=pl.BlockSpec((None, c_total, hw), lambda i: (i, 0, 0)),
        ),
        compiler_params=pltpu.CompilerParams(
            dimension_semantics=("parallel",)),
    )(x_flat, wcat, bcat, w3, b3, w5, b5, w4, b4)

    return out.reshape(n, c_total, h, w)                 # already NCHW concat


# ----------------------------------------------------------------------------
# Pure-JAX reference (correctness check)
# ----------------------------------------------------------------------------
def conv_block_ref(params, x_nhwc):
    _, _, k, _ = params["w"].shape
    pad = (k - 1) // 2
    w_hwio = jnp.transpose(params["w"], (2, 3, 1, 0))
    y = lax.conv_general_dilated(
        x_nhwc, w_hwio, window_strides=(1, 1),
        padding=[(pad, pad), (pad, pad)],
        dimension_numbers=("NHWC", "HWIO", "NHWC"))
    y = y + params["b"]
    y = (y - params["mean"]) / jnp.sqrt(params["var"] + BN_EPS)
    y = y * params["gamma"] + params["beta"]
    return jnp.maximum(y, 0.0)


def inception_ref(params, x_nchw):
    x = jnp.transpose(x_nchw, (0, 2, 3, 1))
    y1 = conv_block_ref(params["b1"], x)
    y2 = conv_block_ref(params["b2b"], conv_block_ref(params["b2a"], x))
    y3 = conv_block_ref(params["b3b"], conv_block_ref(params["b3a"], x))
    pooled = lax.reduce_window(
        x, -jnp.inf, lax.max, (1, 3, 3, 1), (1, 1, 1, 1),
        [(0, 0), (1, 1), (1, 1), (0, 0)])
    y4 = conv_block_ref(params["b4"], pooled)
    y = jnp.concatenate([y1, y2, y3, y4], axis=-1)
    return jnp.transpose(y, (0, 3, 1, 2))


# ----------------------------------------------------------------------------
if __name__ == "__main__":
    key = jax.random.PRNGKey(0)
    k_param, k_x = jax.random.split(key)

    # Small Inception config: Inception(4, 16, 8, 16, 4, 8, 8)
    in_ch, out_1_1, red_3_3, out_3_3 = 4, 16, 8, 16
    red_5_5, out_5_5, out_1_1pool = 4, 8, 8

    params = init_inception(k_param, in_ch, out_1_1, red_3_3, out_3_3,
                            red_5_5, out_5_5, out_1_1pool)

    # Input in PyTorch NCHW layout.
    x = jax.random.normal(k_x, (2, in_ch, 16, 16), jnp.float32)

    out = jax.block_until_ready(inception_forward(params, x))

    expected_channels = out_1_1 + out_3_3 + out_5_5 + out_1_1pool
    assert out.shape == (2, expected_channels, 16, 16), out.shape

    ref = jax.block_until_ready(inception_ref(params, x))
    np.testing.assert_allclose(np.asarray(out), np.asarray(ref),
                               rtol=1e-4, atol=1e-4)

    print("KERNEL_OK")
</pallas_src>

<mosaic_0001>
module attributes {stable_mosaic.version = 11 : i64} {
  func.func @_inception_kernel(%arg0: i32, %arg1: memref<1x4x256xf32, #tpu.memory_space<vmem>>, %arg2: memref<28x4xf32, #tpu.memory_space<vmem>>, %arg3: memref<28x1xf32, #tpu.memory_space<vmem>>, %arg4: memref<16x72xf32, #tpu.memory_space<vmem>>, %arg5: memref<16x1xf32, #tpu.memory_space<vmem>>, %arg6: memref<8x100xf32, #tpu.memory_space<vmem>>, %arg7: memref<8x1xf32, #tpu.memory_space<vmem>>, %arg8: memref<8x4xf32, #tpu.memory_space<vmem>>, %arg9: memref<8x1xf32, #tpu.memory_space<vmem>>, %arg10: memref<1x48x256xf32, #tpu.memory_space<vmem>>) attributes {dimension_semantics = [#tpu.dimension_semantics<parallel>], iteration_bounds = array<i64: 2>, scalar_prefetch = 0 : i64, scratch_operands = 0 : i64, tpu.core_type = #tpu.core_type<tc>, window_params = [{transform_indices = @transform_0, window_bounds = array<i64: 1, 4, 256>}, {pipeline_mode = #tpu.pipeline_mode<synchronous>, transform_indices = @transform_1, window_bounds = array<i64: 28, 4>}, {pipeline_mode = #tpu.pipeline_mode<synchronous>, transform_indices = @transform_2, window_bounds = array<i64: 28, 1>}, {pipeline_mode = #tpu.pipeline_mode<synchronous>, transform_indices = @transform_3, window_bounds = array<i64: 16, 72>}, {pipeline_mode = #tpu.pipeline_mode<synchronous>, transform_indices = @transform_4, window_bounds = array<i64: 16, 1>}, {pipeline_mode = #tpu.pipeline_mode<synchronous>, transform_indices = @transform_5, window_bounds = array<i64: 8, 100>}, {pipeline_mode = #tpu.pipeline_mode<synchronous>, transform_indices = @transform_6, window_bounds = array<i64: 8, 1>}, {pipeline_mode = #tpu.pipeline_mode<synchronous>, transform_indices = @transform_7, window_bounds = array<i64: 8, 4>}, {pipeline_mode = #tpu.pipeline_mode<synchronous>, transform_indices = @transform_8, window_bounds = array<i64: 8, 1>}, {transform_indices = @transform_9, window_bounds = array<i64: 1, 48, 256>}]} {
    %c0 = arith.constant 0 : index
    %c0_0 = arith.constant 0 : index
    %c0_1 = arith.constant 0 : index
    %0 = vector.load %arg1[%c0, %c0_0, %c0_1] : memref<1x4x256xf32, #tpu.memory_space<vmem>>, vector<1x4x256xf32>
    %1 = vector.shape_cast %0 : vector<1x4x256xf32> to vector<4x256xf32>
    %c0_2 = arith.constant 0 : index
    %c0_3 = arith.constant 0 : index
    %2 = vector.load %arg2[%c0_2, %c0_3] : memref<28x4xf32, #tpu.memory_space<vmem>>, vector<28x4xf32>
    %cst = arith.constant dense<0.000000e+00> : vector<28x256xf32>
    %3 = tpu.matmul %2, %1, %cst {dimension_numbers = #tpu.dot_dimension_numbers<[1], [0], [0], [1], [0, 0, 1, 1], [], []>} : vector<28x4xf32>, vector<4x256xf32>, vector<28x256xf32> -> vector<28x256xf32>
    %c0_4 = arith.constant 0 : index
    %c0_5 = arith.constant 0 : index
    %4 = vector.load %arg3[%c0_4, %c0_5] : memref<28x1xf32, #tpu.memory_space<vmem>>, vector<28x1xf32>
    %5 = vector.broadcast %4 : vector<28x1xf32> to vector<28x256xf32>
    %6 = arith.addf %3, %5 : vector<28x256xf32>
    %cst_6 = arith.constant 0.000000e+00 : f32
    %7 = vector.broadcast %cst_6 : f32 to vector<28x256xf32>
    %8 = arith.maximumf %6, %7 : vector<28x256xf32>
    %9 = vector.extract_strided_slice %8 {offsets = [0, 0], sizes = [16, 256], strides = [1, 1]} : vector<28x256xf32> to vector<16x256xf32>
    %c0_7 = arith.constant 0 : index
    %c0_8 = arith.constant 0 : index
    %c0_9 = arith.constant 0 : index
    %10 = vector.load %arg10[%c0_7, %c0_8, %c0_9] : memref<1x48x256xf32, #tpu.memory_space<vmem>>, vector<1x16x256xf32>
    %11 = vector.shape_cast %10 : vector<1x16x256xf32> to vector<16x256xf32>
    %12 = vector.shape_cast %9 : vector<16x256xf32> to vector<1x16x256xf32>
    tpu.vector_store %arg10[%c0_7, %c0_8, %c0_9], %12 {strides = array<i32>} : memref<1x48x256xf32, #tpu.memory_space<vmem>>, vector<1x16x256xf32>,
    %13 = vector.extract_strided_slice %8 {offsets = [16, 0], sizes = [8, 256], strides = [1, 1]} : vector<28x256xf32> to vector<8x256xf32>
    %14 = vector.extract_strided_slice %8 {offsets = [24, 0], sizes = [4, 256], strides = [1, 1]} : vector<28x256xf32> to vector<4x256xf32>
    %cst_10 = arith.constant 0.000000e+00 : f32
    %15 = vector.broadcast %cst_10 : f32 to vector<8x17xf32>
    %16 = tpu.concatenate %15, %13, %15 in 1 : vector<8x17xf32>, vector<8x256xf32>, vector<8x17xf32> -> vector<8x290xf32>
    %17 = tpu.iota {dimensions = array<i32: 1>} : vector<1x256xi32>
    %c16_i32 = arith.constant 16 : i32
    %c0_i32 = arith.constant 0 : i32
    %18 = arith.cmpi eq, %c16_i32, %c0_i32 : i32
    %c1_i32 = arith.constant 1 : i32
    %19 = arith.select %18, %c1_i32, %c16_i32 : i32
    %20 = vector.broadcast %19 : i32 to vector<1x256xi32>
    %21 = arith.remsi %17, %20 : vector<1x256xi32>
    %c0_i32_11 = arith.constant 0 : i32
    %22 = vector.broadcast %c0_i32_11 : i32 to vector<1x256xi32>
    %23 = arith.cmpi ne, %21, %22 : vector<1x256xi32>
    %c0_i32_12 = arith.constant 0 : i32
    %24 = vector.broadcast %c0_i32_12 : i32 to vector<1x256xi32>
    %25 = arith.cmpi slt, %21, %24 : vector<1x256xi32>
    %c0_i32_13 = arith.constant 0 : i32
    %26 = arith.cmpi slt, %19, %c0_i32_13 : i32
    %27 = vector.broadcast %26 : i1 to vector<1x256xi1>
    %28 = vector.broadcast %27 : vector<1x256xi1> to vector<1x256xi1>
    %29 = arith.xori %25, %28 : vector<1x256xi1>
    %30 = arith.andi %29, %23 : vector<1x256xi1>
    %31 = vector.broadcast %19 : i32 to vector<1x256xi32>
    %32 = arith.addi %21, %31 : vector<1x256xi32>
    %33 = arith.select %30, %32, %21 : vector<1x256xi1>, vector<1x256xi32>
    %34 = vector.extract_strided_slice %16 {offsets = [0, 0], sizes = [8, 256], strides = [1, 1]} : vector<8x290xf32> to vector<8x256xf32>
    %c-1_i32 = arith.constant -1 : i32
    %35 = vector.broadcast %c-1_i32 : i32 to vector<1x256xi32>
    %36 = arith.addi %33, %35 : vector<1x256xi32>
    %c0_i32_14 = arith.constant 0 : i32
    %37 = vector.broadcast %c0_i32_14 : i32 to vector<1x256xi32>
    %38 = arith.cmpi sge, %36, %37 : vector<1x256xi32>
    %c-1_i32_15 = arith.constant -1 : i32
    %39 = vector.broadcast %c-1_i32_15 : i32 to vector<1x256xi32>
    %40 = arith.addi %33, %39 : vector<1x256xi32>
    %c16_i32_16 = arith.constant 16 : i32
    %41 = vector.broadcast %c16_i32_16 : i32 to vector<1x256xi32>
    %42 = arith.cmpi slt, %40, %41 : vector<1x256xi32>
    %43 = arith.andi %38, %42 : vector<1x256xi1>
    %cst_17 = arith.constant 0.000000e+00 : f32
    %44 = vector.shape_cast %43 : vector<1x256xi1> to vector<1x256xi1>
    %45 = vector.broadcast %44 : vector<1x256xi1> to vector<8x256xi1>
    %46 = vector.broadcast %cst_17 : f32 to vector<8x256xf32>
    %47 = arith.select %45, %34, %46 : vector<8x256xi1>, vector<8x256xf32>
    %48 = vector.extract_strided_slice %16 {offsets = [0, 1], sizes = [8, 256], strides = [1, 1]} : vector<8x290xf32> to vector<8x256xf32>
    %c0_i32_18 = arith.constant 0 : i32
    %49 = vector.broadcast %c0_i32_18 : i32 to vector<1x256xi32>
    %50 = arith.addi %33, %49 : vector<1x256xi32>
    %c0_i32_19 = arith.constant 0 : i32
    %51 = vector.broadcast %c0_i32_19 : i32 to vector<1x256xi32>
    %52 = arith.cmpi sge, %50, %51 : vector<1x256xi32>
    %c0_i32_20 = arith.constant 0 : i32
    %53 = vector.broadcast %c0_i32_20 : i32 to vector<1x256xi32>
    %54 = arith.addi %33, %53 : vector<1x256xi32>
    %c16_i32_21 = arith.constant 16 : i32
    %55 = vector.broadcast %c16_i32_21 : i32 to vector<1x256xi32>
    %56 = arith.cmpi slt, %54, %55 : vector<1x256xi32>
    %57 = arith.andi %52, %56 : vector<1x256xi1>
    %cst_22 = arith.constant 0.000000e+00 : f32
    %58 = vector.shape_cast %57 : vector<1x256xi1> to vector<1x256xi1>
    %59 = vector.broadcast %58 : vector<1x256xi1> to vector<8x256xi1>
    %60 = vector.broadcast %cst_22 : f32 to vector<8x256xf32>
    %61 = arith.select %59, %48, %60 : vector<8x256xi1>, vector<8x256xf32>
    %62 = vector.extract_strided_slice %16 {offsets = [0, 2], sizes = [8, 256], strides = [1, 1]} : vector<8x290xf32> to vector<8x256xf32>
    %c1_i32_23 = arith.constant 1 : i32
    %63 = vector.broadcast %c1_i32_23 : i32 to vector<1x256xi32>
    %64 = arith.addi %33, %63 : vector<1x256xi32>
    %c0_i32_24 = arith.constant 0 : i32
    %65 = vector.broadcast %c0_i32_24 : i32 to vector<1x256xi32>
    %66 = arith.cmpi sge, %64, %65 : vector<1x256xi32>
    %c1_i32_25 = arith.constant 1 : i32
    %67 = vector.broadcast %c1_i32_25 : i32 to vector<1x256xi32>
    %68 = arith.addi %33, %67 : vector<1x256xi32>
    %c16_i32_26 = arith.constant 16 : i32
    %69 = vector.broadcast %c16_i32_26 : i32 to vector<1x256xi32>
    %70 = arith.cmpi slt, %68, %69 : vector<1x256xi32>
    %71 = arith.andi %66, %70 : vector<1x256xi1>
    %cst_27 = arith.constant 0.000000e+00 : f32
    %72 = vector.shape_cast %71 : vector<1x256xi1> to vector<1x256xi1>
    %73 = vector.broadcast %72 : vector<1x256xi1> to vector<8x256xi1>
    %74 = vector.broadcast %cst_27 : f32 to vector<8x256xf32>
    %75 = arith.select %73, %62, %74 : vector<8x256xi1>, vector<8x256xf32>
    %76 = vector.extract_strided_slice %16 {offsets = [0, 16], sizes = [8, 256], strides = [1, 1]} : vector<8x290xf32> to vector<8x256xf32>
    %c-1_i32_28 = arith.constant -1 : i32
    %77 = vector.broadcast %c-1_i32_28 : i32 to vector<1x256xi32>
    %78 = arith.addi %33, %77 : vector<1x256xi32>
    %c0_i32_29 = arith.constant 0 : i32
    %79 = vector.broadcast %c0_i32_29 : i32 to vector<1x256xi32>
    %80 = arith.cmpi sge, %78, %79 : vector<1x256xi32>
    %c-1_i32_30 = arith.constant -1 : i32
    %81 = vector.broadcast %c-1_i32_30 : i32 to vector<1x256xi32>
    %82 = arith.addi %33, %81 : vector<1x256xi32>
    %c16_i32_31 = arith.constant 16 : i32
    %83 = vector.broadcast %c16_i32_31 : i32 to vector<1x256xi32>
    %84 = arith.cmpi slt, %82, %83 : vector<1x256xi32>
    %85 = arith.andi %80, %84 : vector<1x256xi1>
    %cst_32 = arith.constant 0.000000e+00 : f32
    %86 = vector.shape_cast %85 : vector<1x256xi1> to vector<1x256xi1>
    %87 = vector.broadcast %86 : vector<1x256xi1> to vector<8x256xi1>
    %88 = vector.broadcast %cst_32 : f32 to vector<8x256xf32>
    %89 = arith.select %87, %76, %88 : vector<8x256xi1>, vector<8x256xf32>
    %90 = vector.extract_strided_slice %16 {offsets = [0, 18], sizes = [8, 256], strides = [1, 1]} : vector<8x290xf32> to vector<8x256xf32>
    %c1_i32_33 = arith.constant 1 : i32
    %91 = vector.broadcast %c1_i32_33 : i32 to vector<1x256xi32>
    %92 = arith.addi %33, %91 : vector<1x256xi32>
    %c0_i32_34 = arith.constant 0 : i32
    %93 = vector.broadcast %c0_i32_34 : i32 to vector<1x256xi32>
    %94 = arith.cmpi sge, %92, %93 : vector<1x256xi32>
    %c1_i32_35 = arith.constant 1 : i32
    %95 = vector.broadcast %c1_i32_35 : i32 to vector<1x256xi32>
    %96 = arith.addi %33, %95 : vector<1x256xi32>
    %c16_i32_36 = arith.constant 16 : i32
    %97 = vector.broadcast %c16_i32_36 : i32 to vector<1x256xi32>
    %98 = arith.cmpi slt, %96, %97 : vector<1x256xi32>
    %99 = arith.andi %94, %98 : vector<1x256xi1>
    %cst_37 = arith.constant 0.000000e+00 : f32
    %100 = vector.shape_cast %99 : vector<1x256xi1> to vector<1x256xi1>
    %101 = vector.broadcast %100 : vector<1x256xi1> to vector<8x256xi1>
    %102 = vector.broadcast %cst_37 : f32 to vector<8x256xf32>
    %103 = arith.select %101, %90, %102 : vector<8x256xi1>, vector<8x256xf32>
    %104 = vector.extract_strided_slice %16 {offsets = [0, 32], sizes = [8, 256], strides = [1, 1]} : vector<8x290xf32> to vector<8x256xf32>
    %c-1_i32_38 = arith.constant -1 : i32
    %105 = vector.broadcast %c-1_i32_38 : i32 to vector<1x256xi32>
    %106 = arith.addi %33, %105 : vector<1x256xi32>
    %c0_i32_39 = arith.constant 0 : i32
    %107 = vector.broadcast %c0_i32_39 : i32 to vector<1x256xi32>
    %108 = arith.cmpi sge, %106, %107 : vector<1x256xi32>
    %c-1_i32_40 = arith.constant -1 : i32
    %109 = vector.broadcast %c-1_i32_40 : i32 to vector<1x256xi32>
    %110 = arith.addi %33, %109 : vector<1x256xi32>
    %c16_i32_41 = arith.constant 16 : i32
    %111 = vector.broadcast %c16_i32_41 : i32 to vector<1x256xi32>
    %112 = arith.cmpi slt, %110, %111 : vector<1x256xi32>
    %113 = arith.andi %108, %112 : vector<1x256xi1>
    %cst_42 = arith.constant 0.000000e+00 : f32
    %114 = vector.shape_cast %113 : vector<1x256xi1> to vector<1x256xi1>
    %115 = vector.broadcast %114 : vector<1x256xi1> to vector<8x256xi1>
    %116 = vector.broadcast %cst_42 : f32 to vector<8x256xf32>
    %117 = arith.select %115, %104, %116 : vector<8x256xi1>, vector<8x256xf32>
    %118 = vector.extract_strided_slice %16 {offsets = [0, 33], sizes = [8, 256], strides = [1, 1]} : vector<8x290xf32> to vector<8x256xf32>
    %c0_i32_43 = arith.constant 0 : i32
    %119 = vector.broadcast %c0_i32_43 : i32 to vector<1x256xi32>
    %120 = arith.addi %33, %119 : vector<1x256xi32>
    %c0_i32_44 = arith.constant 0 : i32
    %121 = vector.broadcast %c0_i32_44 : i32 to vector<1x256xi32>
    %122 = arith.cmpi sge, %120, %121 : vector<1x256xi32>
    %c0_i32_45 = arith.constant 0 : i32
    %123 = vector.broadcast %c0_i32_45 : i32 to vector<1x256xi32>
    %124 = arith.addi %33, %123 : vector<1x256xi32>
    %c16_i32_46 = arith.constant 16 : i32
    %125 = vector.broadcast %c16_i32_46 : i32 to vector<1x256xi32>
    %126 = arith.cmpi slt, %124, %125 : vector<1x256xi32>
    %127 = arith.andi %122, %126 : vector<1x256xi1>
    %cst_47 = arith.constant 0.000000e+00 : f32
    %128 = vector.shape_cast %127 : vector<1x256xi1> to vector<1x256xi1>
    %129 = vector.broadcast %128 : vector<1x256xi1> to vector<8x256xi1>
    %130 = vector.broadcast %cst_47 : f32 to vector<8x256xf32>
    %131 = arith.select %129, %118, %130 : vector<8x256xi1>, vector<8x256xf32>
    %132 = vector.extract_strided_slice %16 {offsets = [0, 34], sizes = [8, 256], strides = [1, 1]} : vector<8x290xf32> to vector<8x256xf32>
    %c1_i32_48 = arith.constant 1 : i32
    %133 = vector.broadcast %c1_i32_48 : i32 to vector<1x256xi32>
    %134 = arith.addi %33, %133 : vector<1x256xi32>
    %c0_i32_49 = arith.constant 0 : i32
    %135 = vector.broadcast %c0_i32_49 : i32 to vector<1x256xi32>
    %136 = arith.cmpi sge, %134, %135 : vector<1x256xi32>
    %c1_i32_50 = arith.constant 1 : i32
    %137 = vector.broadcast %c1_i32_50 : i32 to vector<1x256xi32>
    %138 = arith.addi %33, %137 : vector<1x256xi32>
    %c16_i32_51 = arith.constant 16 : i32
    %139 = vector.broadcast %c16_i32_51 : i32 to vector<1x256xi32>
    %140 = arith.cmpi slt, %138, %139 : vector<1x256xi32>
    %141 = arith.andi %136, %140 : vector<1x256xi1>
    %cst_52 = arith.constant 0.000000e+00 : f32
    %142 = vector.shape_cast %141 : vector<1x256xi1> to vector<1x256xi1>
    %143 = vector.broadcast %142 : vector<1x256xi1> to vector<8x256xi1>
    %144 = vector.broadcast %cst_52 : f32 to vector<8x256xf32>
    %145 = arith.select %143, %132, %144 : vector<8x256xi1>, vector<8x256xf32>
    %146 = tpu.concatenate %47, %61, %75, %89, %13, %103, %117, %131, %145 in 0 : vector<8x256xf32>, vector<8x256xf32>, vector<8x256xf32>, vector<8x256xf32>, vector<8x256xf32>, vector<8x256xf32>, vector<8x256xf32>, vector<8x256xf32>, vector<8x256xf32> -> vector<72x256xf32>
    %c0_53 = arith.constant 0 : index
    %c0_54 = arith.constant 0 : index
    %147 = vector.load %arg4[%c0_53, %c0_54] : memref<16x72xf32, #tpu.memory_space<vmem>>, vector<16x72xf32>
    %cst_55 = arith.constant dense<0.000000e+00> : vector<16x256xf32>
    %148 = tpu.matmul %147, %146, %cst_55 {dimension_numbers = #tpu.dot_dimension_numbers<[1], [0], [0], [1], [0, 0, 1, 1], [], []>} : vector<16x72xf32>, vector<72x256xf32>, vector<16x256xf32> -> vector<16x256xf32>
    %c0_56 = arith.constant 0 : index
    %c0_57 = arith.constant 0 : index
    %149 = vector.load %arg5[%c0_56, %c0_57] : memref<16x1xf32, #tpu.memory_space<vmem>>, vector<16x1xf32>
    %150 = vector.broadcast %149 : vector<16x1xf32> to vector<16x256xf32>
    %151 = arith.addf %148, %150 : vector<16x256xf32>
    %cst_58 = arith.constant 0.000000e+00 : f32
    %152 = vector.broadcast %cst_58 : f32 to vector<16x256xf32>
    %153 = arith.maximumf %151, %152 : vector<16x256xf32>
    %c0_59 = arith.constant 0 : index
    %c16 = arith.constant 16 : index
    %c0_60 = arith.constant 0 : index
    %154 = vector.load %arg10[%c0_59, %c16, %c0_60] : memref<1x48x256xf32, #tpu.memory_space<vmem>>, vector<1x16x256xf32>
    %155 = vector.shape_cast %154 : vector<1x16x256xf32> to vector<16x256xf32>
    %156 = vector.shape_cast %153 : vector<16x256xf32> to vector<1x16x256xf32>
    tpu.vector_store %arg10[%c0_59, %c16, %c0_60], %156 {strides = array<i32>} : memref<1x48x256xf32, #tpu.memory_space<vmem>>, vector<1x16x256xf32>,
    %cst_61 = arith.constant 0.000000e+00 : f32
    %157 = vector.broadcast %cst_61 : f32 to vector<4x34xf32>
    %158 = tpu.concatenate %157, %14, %157 in 1 : vector<4x34xf32>, vector<4x256xf32>, vector<4x34xf32> -> vector<4x324xf32>
    %159 = tpu.iota {dimensions = array<i32: 1>} : vector<1x256xi32>
    %c16_i32_62 = arith.constant 16 : i32
    %c0_i32_63 = arith.constant 0 : i32
    %160 = arith.cmpi eq, %c16_i32_62, %c0_i32_63 : i32
    %c1_i32_64 = arith.constant 1 : i32
    %161 = arith.select %160, %c1_i32_64, %c16_i32_62 : i32
    %162 = vector.broadcast %161 : i32 to vector<1x256xi32>
    %163 = arith.remsi %159, %162 : vector<1x256xi32>
    %c0_i32_65 = arith.constant 0 : i32
    %164 = vector.broadcast %c0_i32_65 : i32 to vector<1x256xi32>
    %165 = arith.cmpi ne, %163, %164 : vector<1x256xi32>
    %c0_i32_66 = arith.constant 0 : i32
    %166 = vector.broadcast %c0_i32_66 : i32 to vector<1x256xi32>
    %167 = arith.cmpi slt, %163, %166 : vector<1x256xi32>
    %c0_i32_67 = arith.constant 0 : i32
    %168 = arith.cmpi slt, %161, %c0_i32_67 : i32
    %169 = vector.broadcast %168 : i1 to vector<1x256xi1>
    %170 = vector.broadcast %169 : vector<1x256xi1> to vector<1x256xi1>
    %171 = arith.xori %167, %170 : vector<1x256xi1>
    %172 = arith.andi %171, %165 : vector<1x256xi1>
    %173 = vector.broadcast %161 : i32 to vector<1x256xi32>
    %174 = arith.addi %163, %173 : vector<1x256xi32>
    %175 = arith.select %172, %174, %163 : vector<1x256xi1>, vector<1x256xi32>
    %176 = vector.extract_strided_slice %158 {offsets = [0, 0], sizes = [4, 256], strides = [1, 1]} : vector<4x324xf32> to vector<4x256xf32>
    %c-2_i32 = arith.constant -2 : i32
    %177 = vector.broadcast %c-2_i32 : i32 to vector<1x256xi32>
    %178 = arith.addi %175, %177 : vector<1x256xi32>
    %c0_i32_68 = arith.constant 0 : i32
    %179 = vector.broadcast %c0_i32_68 : i32 to vector<1x256xi32>
    %180 = arith.cmpi sge, %178, %179 : vector<1x256xi32>
    %c-2_i32_69 = arith.constant -2 : i32
    %181 = vector.broadcast %c-2_i32_69 : i32 to vector<1x256xi32>
    %182 = arith.addi %175, %181 : vector<1x256xi32>
    %c16_i32_70 = arith.constant 16 : i32
    %183 = vector.broadcast %c16_i32_70 : i32 to vector<1x256xi32>
    %184 = arith.cmpi slt, %182, %183 : vector<1x256xi32>
    %185 = arith.andi %180, %184 : vector<1x256xi1>
    %cst_71 = arith.constant 0.000000e+00 : f32
    %186 = vector.shape_cast %185 : vector<1x256xi1> to vector<1x256xi1>
    %187 = vector.broadcast %186 : vector<1x256xi1> to vector<4x256xi1>
    %188 = vector.broadcast %cst_71 : f32 to vector<4x256xf32>
    %189 = arith.select %187, %176, %188 : vector<4x256xi1>, vector<4x256xf32>
    %190 = vector.extract_strided_slice %158 {offsets = [0, 1], sizes = [4, 256], strides = [1, 1]} : vector<4x324xf32> to vector<4x256xf32>
    %c-1_i32_72 = arith.constant -1 : i32
    %191 = vector.broadcast %c-1_i32_72 : i32 to vector<1x256xi32>
    %192 = arith.addi %175, %191 : vector<1x256xi32>
    %c0_i32_73 = arith.constant 0 : i32
    %193 = vector.broadcast %c0_i32_73 : i32 to vector<1x256xi32>
    %194 = arith.cmpi sge, %192, %193 : vector<1x256xi32>
    %c-1_i32_74 = arith.constant -1 : i32
    %195 = vector.broadcast %c-1_i32_74 : i32 to vector<1x256xi32>
    %196 = arith.addi %175, %195 : vector<1x256xi32>
    %c16_i32_75 = arith.constant 16 : i32
    %197 = vector.broadcast %c16_i32_75 : i32 to vector<1x256xi32>
    %198 = arith.cmpi slt, %196, %197 : vector<1x256xi32>
    %199 = arith.andi %194, %198 : vector<1x256xi1>
    %cst_76 = arith.constant 0.000000e+00 : f32
    %200 = vector.shape_cast %199 : vector<1x256xi1> to vector<1x256xi1>
    %201 = vector.broadcast %200 : vector<1x256xi1> to vector<4x256xi1>
    %202 = vector.broadcast %cst_76 : f32 to vector<4x256xf32>
    %203 = arith.select %201, %190, %202 : vector<4x256xi1>, vector<4x256xf32>
    %204 = vector.extract_strided_slice %158 {offsets = [0, 2], sizes = [4, 256], strides = [1, 1]} : vector<4x324xf32> to vector<4x256xf32>
    %c0_i32_77 = arith.constant 0 : i32
    %205 = vector.broadcast %c0_i32_77 : i32 to vector<1x256xi32>
    %206 = arith.addi %175, %205 : vector<1x256xi32>
    %c0_i32_78 = arith.constant 0 : i32
    %207 = vector.broadcast %c0_i32_78 : i32 to vector<1x256xi32>
    %208 = arith.cmpi sge, %206, %207 : vector<1x256xi32>
    %c0_i32_79 = arith.constant 0 : i32
    %209 = vector.broadcast %c0_i32_79 : i32 to vector<1x256xi32>
    %210 = arith.addi %175, %209 : vector<1x256xi32>
    %c16_i32_80 = arith.constant 16 : i32
    %211 = vector.broadcast %c16_i32_80 : i32 to vector<1x256xi32>
    %212 = arith.cmpi slt, %210, %211 : vector<1x256xi32>
    %213 = arith.andi %208, %212 : vector<1x256xi1>
    %cst_81 = arith.constant 0.000000e+00 : f32
    %214 = vector.shape_cast %213 : vector<1x256xi1> to vector<1x256xi1>
    %215 = vector.broadcast %214 : vector<1x256xi1> to vector<4x256xi1>
    %216 = vector.broadcast %cst_81 : f32 to vector<4x256xf32>
    %217 = arith.select %215, %204, %216 : vector<4x256xi1>, vector<4x256xf32>
    %218 = vector.extract_strided_slice %158 {offsets = [0, 3], sizes = [4, 256], strides = [1, 1]} : vector<4x324xf32> to vector<4x256xf32>
    %c1_i32_82 = arith.constant 1 : i32
    %219 = vector.broadcast %c1_i32_82 : i32 to vector<1x256xi32>
    %220 = arith.addi %175, %219 : vector<1x256xi32>
    %c0_i32_83 = arith.constant 0 : i32
    %221 = vector.broadcast %c0_i32_83 : i32 to vector<1x256xi32>
    %222 = arith.cmpi sge, %220, %221 : vector<1x256xi32>
    %c1_i32_84 = arith.constant 1 : i32
    %223 = vector.broadcast %c1_i32_84 : i32 to vector<1x256xi32>
    %224 = arith.addi %175, %223 : vector<1x256xi32>
    %c16_i32_85 = arith.constant 16 : i32
    %225 = vector.broadcast %c16_i32_85 : i32 to vector<1x256xi32>
    %226 = arith.cmpi slt, %224, %225 : vector<1x256xi32>
    %227 = arith.andi %222, %226 : vector<1x256xi1>
    %cst_86 = arith.constant 0.000000e+00 : f32
    %228 = vector.shape_cast %227 : vector<1x256xi1> to vector<1x256xi1>
    %229 = vector.broadcast %228 : vector<1x256xi1> to vector<4x256xi1>
    %230 = vector.broadcast %cst_86 : f32 to vector<4x256xf32>
    %231 = arith.select %229, %218, %230 : vector<4x256xi1>, vector<4x256xf32>
    %232 = vector.extract_strided_slice %158 {offsets = [0, 4], sizes = [4, 256], strides = [1, 1]} : vector<4x324xf32> to vector<4x256xf32>
    %c2_i32 = arith.constant 2 : i32
    %233 = vector.broadcast %c2_i32 : i32 to vector<1x256xi32>
    %234 = arith.addi %175, %233 : vector<1x256xi32>
    %c0_i32_87 = arith.constant 0 : i32
    %235 = vector.broadcast %c0_i32_87 : i32 to vector<1x256xi32>
    %236 = arith.cmpi sge, %234, %235 : vector<1x256xi32>
    %c2_i32_88 = arith.constant 2 : i32
    %237 = vector.broadcast %c2_i32_88 : i32 to vector<1x256xi32>
    %238 = arith.addi %175, %237 : vector<1x256xi32>
    %c16_i32_89 = arith.constant 16 : i32
    %239 = vector.broadcast %c16_i32_89 : i32 to vector<1x256xi32>
    %240 = arith.cmpi slt, %238, %239 : vector<1x256xi32>
    %241 = arith.andi %236, %240 : vector<1x256xi1>
    %cst_90 = arith.constant 0.000000e+00 : f32
    %242 = vector.shape_cast %241 : vector<1x256xi1> to vector<1x256xi1>
    %243 = vector.broadcast %242 : vector<1x256xi1> to vector<4x256xi1>
    %244 = vector.broadcast %cst_90 : f32 to vector<4x256xf32>
    %245 = arith.select %243, %232, %244 : vector<4x256xi1>, vector<4x256xf32>
    %246 = vector.extract_strided_slice %158 {offsets = [0, 16], sizes = [4, 256], strides = [1, 1]} : vector<4x324xf32> to vector<4x256xf32>
    %c-2_i32_91 = arith.constant -2 : i32
    %247 = vector.broadcast %c-2_i32_91 : i32 to vector<1x256xi32>
    %248 = arith.addi %175, %247 : vector<1x256xi32>
    %c0_i32_92 = arith.constant 0 : i32
    %249 = vector.broadcast %c0_i32_92 : i32 to vector<1x256xi32>
    %250 = arith.cmpi sge, %248, %249 : vector<1x256xi32>
    %c-2_i32_93 = arith.constant -2 : i32
    %251 = vector.broadcast %c-2_i32_93 : i32 to vector<1x256xi32>
    %252 = arith.addi %175, %251 : vector<1x256xi32>
    %c16_i32_94 = arith.constant 16 : i32
    %253 = vector.broadcast %c16_i32_94 : i32 to vector<1x256xi32>
    %254 = arith.cmpi slt, %252, %253 : vector<1x256xi32>
    %255 = arith.andi %250, %254 : vector<1x256xi1>
    %cst_95 = arith.constant 0.000000e+00 : f32
    %256 = vector.shape_cast %255 : vector<1x256xi1> to vector<1x256xi1>
    %257 = vector.broadcast %256 : vector<1x256xi1> to vector<4x256xi1>
    %258 = vector.broadcast %cst_95 : f32 to vector<4x256xf32>
    %259 = arith.select %257, %246, %258 : vector<4x256xi1>, vector<4x256xf32>
    %260 = vector.extract_strided_slice %158 {offsets = [0, 17], sizes = [4, 256], strides = [1, 1]} : vector<4x324xf32> to vector<4x256xf32>
    %c-1_i32_96 = arith.constant -1 : i32
    %261 = vector.broadcast %c-1_i32_96 : i32 to vector<1x256xi32>
    %262 = arith.addi %175, %261 : vector<1x256xi32>
    %c0_i32_97 = arith.constant 0 : i32
    %263 = vector.broadcast %c0_i32_97 : i32 to vector<1x256xi32>
    %264 = arith.cmpi sge, %262, %263 : vector<1x256xi32>
    %c-1_i32_98 = arith.constant -1 : i32
    %265 = vector.broadcast %c-1_i32_98 : i32 to vector<1x256xi32>
    %266 = arith.addi %175, %265 : vector<1x256xi32>
    %c16_i32_99 = arith.constant 16 : i32
    %267 = vector.broadcast %c16_i32_99 : i32 to vector<1x256xi32>
    %268 = arith.cmpi slt, %266, %267 : vector<1x256xi32>
    %269 = arith.andi %264, %268 : vector<1x256xi1>
    %cst_100 = arith.constant 0.000000e+00 : f32
    %270 = vector.shape_cast %269 : vector<1x256xi1> to vector<1x256xi1>
    %271 = vector.broadcast %270 : vector<1x256xi1> to vector<4x256xi1>
    %272 = vector.broadcast %cst_100 : f32 to vector<4x256xf32>
    %273 = arith.select %271, %260, %272 : vector<4x256xi1>, vector<4x256xf32>
    %274 = vector.extract_strided_slice %158 {offsets = [0, 18], sizes = [4, 256], strides = [1, 1]} : vector<4x324xf32> to vector<4x256xf32>
    %c0_i32_101 = arith.constant 0 : i32
    %275 = vector.broadcast %c0_i32_101 : i32 to vector<1x256xi32>
    %276 = arith.addi %175, %275 : vector<1x256xi32>
    %c0_i32_102 = arith.constant 0 : i32
    %277 = vector.broadcast %c0_i32_102 : i32 to vector<1x256xi32>
    %278 = arith.cmpi sge, %276, %277 : vector<1x256xi32>
    %c0_i32_103 = arith.constant 0 : i32
    %279 = vector.broadcast %c0_i32_103 : i32 to vector<1x256xi32>
    %280 = arith.addi %175, %279 : vector<1x256xi32>
    %c16_i32_104 = arith.constant 16 : i32
    %281 = vector.broadcast %c16_i32_104 : i32 to vector<1x256xi32>
    %282 = arith.cmpi slt, %280, %281 : vector<1x256xi32>
    %283 = arith.andi %278, %282 : vector<1x256xi1>
    %cst_105 = arith.constant 0.000000e+00 : f32
    %284 = vector.shape_cast %283 : vector<1x256xi1> to vector<1x256xi1>
    %285 = vector.broadcast %284 : vector<1x256xi1> to vector<4x256xi1>
    %286 = vector.broadcast %cst_105 : f32 to vector<4x256xf32>
    %287 = arith.select %285, %274, %286 : vector<4x256xi1>, vector<4x256xf32>
    %288 = vector.extract_strided_slice %158 {offsets = [0, 19], sizes = [4, 256], strides = [1, 1]} : vector<4x324xf32> to vector<4x256xf32>
    %c1_i32_106 = arith.constant 1 : i32
    %289 = vector.broadcast %c1_i32_106 : i32 to vector<1x256xi32>
    %290 = arith.addi %175, %289 : vector<1x256xi32>
    %c0_i32_107 = arith.constant 0 : i32
    %291 = vector.broadcast %c0_i32_107 : i32 to vector<1x256xi32>
    %292 = arith.cmpi sge, %290, %291 : vector<1x256xi32>
    %c1_i32_108 = arith.constant 1 : i32
    %293 = vector.broadcast %c1_i32_108 : i32 to vector<1x256xi32>
    %294 = arith.addi %175, %293 : vector<1x256xi32>
    %c16_i32_109 = arith.constant 16 : i32
    %295 = vector.broadcast %c16_i32_109 : i32 to vector<1x256xi32>
    %296 = arith.cmpi slt, %294, %295 : vector<1x256xi32>
    %297 = arith.andi %292, %296 : vector<1x256xi1>
    %cst_110 = arith.constant 0.000000e+00 : f32
    %298 = vector.shape_cast %297 : vector<1x256xi1> to vector<1x256xi1>
    %299 = vector.broadcast %298 : vector<1x256xi1> to vector<4x256xi1>
    %300 = vector.broadcast %cst_110 : f32 to vector<4x256xf32>
    %301 = arith.select %299, %288, %300 : vector<4x256xi1>, vector<4x256xf32>
    %302 = vector.extract_strided_slice %158 {offsets = [0, 20], sizes = [4, 256], strides = [1, 1]} : vector<4x324xf32> to vector<4x256xf32>
    %c2_i32_111 = arith.constant 2 : i32
    %303 = vector.broadcast %c2_i32_111 : i32 to vector<1x256xi32>
    %304 = arith.addi %175, %303 : vector<1x256xi32>
    %c0_i32_112 = arith.constant 0 : i32
    %305 = vector.broadcast %c0_i32_112 : i32 to vector<1x256xi32>
    %306 = arith.cmpi sge, %304, %305 : vector<1x256xi32>
    %c2_i32_113 = arith.constant 2 : i32
    %307 = vector.broadcast %c2_i32_113 : i32 to vector<1x256xi32>
    %308 = arith.addi %175, %307 : vector<1x256xi32>
    %c16_i32_114 = arith.constant 16 : i32
    %309 = vector.broadcast %c16_i32_114 : i32 to vector<1x256xi32>
    %310 = arith.cmpi slt, %308, %309 : vector<1x256xi32>
    %311 = arith.andi %306, %310 : vector<1x256xi1>
    %cst_115 = arith.constant 0.000000e+00 : f32
    %312 = vector.shape_cast %311 : vector<1x256xi1> to vector<1x256xi1>
    %313 = vector.broadcast %312 : vector<1x256xi1> to vector<4x256xi1>
    %314 = vector.broadcast %cst_115 : f32 to vector<4x256xf32>
    %315 = arith.select %313, %302, %314 : vector<4x256xi1>, vector<4x256xf32>
    %316 = vector.extract_strided_slice %158 {offsets = [0, 32], sizes = [4, 256], strides = [1, 1]} : vector<4x324xf32> to vector<4x256xf32>
    %c-2_i32_116 = arith.constant -2 : i32
    %317 = vector.broadcast %c-2_i32_116 : i32 to vector<1x256xi32>
    %318 = arith.addi %175, %317 : vector<1x256xi32>
    %c0_i32_117 = arith.constant 0 : i32
    %319 = vector.broadcast %c0_i32_117 : i32 to vector<1x256xi32>
    %320 = arith.cmpi sge, %318, %319 : vector<1x256xi32>
    %c-2_i32_118 = arith.constant -2 : i32
    %321 = vector.broadcast %c-2_i32_118 : i32 to vector<1x256xi32>
    %322 = arith.addi %175, %321 : vector<1x256xi32>
    %c16_i32_119 = arith.constant 16 : i32
    %323 = vector.broadcast %c16_i32_119 : i32 to vector<1x256xi32>
    %324 = arith.cmpi slt, %322, %323 : vector<1x256xi32>
    %325 = arith.andi %320, %324 : vector<1x256xi1>
    %cst_120 = arith.constant 0.000000e+00 : f32
    %326 = vector.shape_cast %325 : vector<1x256xi1> to vector<1x256xi1>
    %327 = vector.broadcast %326 : vector<1x256xi1> to vector<4x256xi1>
    %328 = vector.broadcast %cst_120 : f32 to vector<4x256xf32>
    %329 = arith.select %327, %316, %328 : vector<4x256xi1>, vector<4x256xf32>
    %330 = vector.extract_strided_slice %158 {offsets = [0, 33], sizes = [4, 256], strides = [1, 1]} : vector<4x324xf32> to vector<4x256xf32>
    %c-1_i32_121 = arith.constant -1 : i32
    %331 = vector.broadcast %c-1_i32_121 : i32 to vector<1x256xi32>
    %332 = arith.addi %175, %331 : vector<1x256xi32>
    %c0_i32_122 = arith.constant 0 : i32
    %333 = vector.broadcast %c0_i32_122 : i32 to vector<1x256xi32>
    %334 = arith.cmpi sge, %332, %333 : vector<1x256xi32>
    %c-1_i32_123 = arith.constant -1 : i32
    %335 = vector.broadcast %c-1_i32_123 : i32 to vector<1x256xi32>
    %336 = arith.addi %175, %335 : vector<1x256xi32>
    %c16_i32_124 = arith.constant 16 : i32
    %337 = vector.broadcast %c16_i32_124 : i32 to vector<1x256xi32>
    %338 = arith.cmpi slt, %336, %337 : vector<1x256xi32>
    %339 = arith.andi %334, %338 : vector<1x256xi1>
    %cst_125 = arith.constant 0.000000e+00 : f32
    %340 = vector.shape_cast %339 : vector<1x256xi1> to vector<1x256xi1>
    %341 = vector.broadcast %340 : vector<1x256xi1> to vector<4x256xi1>
    %342 = vector.broadcast %cst_125 : f32 to vector<4x256xf32>
    %343 = arith.select %341, %330, %342 : vector<4x256xi1>, vector<4x256xf32>
    %344 = vector.extract_strided_slice %158 {offsets = [0, 35], sizes = [4, 256], strides = [1, 1]} : vector<4x324xf32> to vector<4x256xf32>
    %c1_i32_126 = arith.constant 1 : i32
    %345 = vector.broadcast %c1_i32_126 : i32 to vector<1x256xi32>
    %346 = arith.addi %175, %345 : vector<1x256xi32>
    %c0_i32_127 = arith.constant 0 : i32
    %347 = vector.broadcast %c0_i32_127 : i32 to vector<1x256xi32>
    %348 = arith.cmpi sge, %346, %347 : vector<1x256xi32>
    %c1_i32_128 = arith.constant 1 : i32
    %349 = vector.broadcast %c1_i32_128 : i32 to vector<1x256xi32>
    %350 = arith.addi %175, %349 : vector<1x256xi32>
    %c16_i32_129 = arith.constant 16 : i32
    %351 = vector.broadcast %c16_i32_129 : i32 to vector<1x256xi32>
    %352 = arith.cmpi slt, %350, %351 : vector<1x256xi32>
    %353 = arith.andi %348, %352 : vector<1x256xi1>
    %cst_130 = arith.constant 0.000000e+00 : f32
    %354 = vector.shape_cast %353 : vector<1x256xi1> to vector<1x256xi1>
    %355 = vector.broadcast %354 : vector<1x256xi1> to vector<4x256xi1>
    %356 = vector.broadcast %cst_130 : f32 to vector<4x256xf32>
    %357 = arith.select %355, %344, %356 : vector<4x256xi1>, vector<4x256xf32>
    %358 = vector.extract_strided_slice %158 {offsets = [0, 36], sizes = [4, 256], strides = [1, 1]} : vector<4x324xf32> to vector<4x256xf32>
    %c2_i32_131 = arith.constant 2 : i32
    %359 = vector.broadcast %c2_i32_131 : i32 to vector<1x256xi32>
    %360 = arith.addi %175, %359 : vector<1x256xi32>
    %c0_i32_132 = arith.constant 0 : i32
    %361 = vector.broadcast %c0_i32_132 : i32 to vector<1x256xi32>
    %362 = arith.cmpi sge, %360, %361 : vector<1x256xi32>
    %c2_i32_133 = arith.constant 2 : i32
    %363 = vector.broadcast %c2_i32_133 : i32 to vector<1x256xi32>
    %364 = arith.addi %175, %363 : vector<1x256xi32>
    %c16_i32_134 = arith.constant 16 : i32
    %365 = vector.broadcast %c16_i32_134 : i32 to vector<1x256xi32>
    %366 = arith.cmpi slt, %364, %365 : vector<1x256xi32>
    %367 = arith.andi %362, %366 : vector<1x256xi1>
    %cst_135 = arith.constant 0.000000e+00 : f32
    %368 = vector.shape_cast %367 : vector<1x256xi1> to vector<1x256xi1>
    %369 = vector.broadcast %368 : vector<1x256xi1> to vector<4x256xi1>
    %370 = vector.broadcast %cst_135 : f32 to vector<4x256xf32>
    %371 = arith.select %369, %358, %370 : vector<4x256xi1>, vector<4x256xf32>
    %372 = vector.extract_strided_slice %158 {offsets = [0, 48], sizes = [4, 256], strides = [1, 1]} : vector<4x324xf32> to vector<4x256xf32>
    %c-2_i32_136 = arith.constant -2 : i32
    %373 = vector.broadcast %c-2_i32_136 : i32 to vector<1x256xi32>
    %374 = arith.addi %175, %373 : vector<1x256xi32>
    %c0_i32_137 = arith.constant 0 : i32
    %375 = vector.broadcast %c0_i32_137 : i32 to vector<1x256xi32>
    %376 = arith.cmpi sge, %374, %375 : vector<1x256xi32>
    %c-2_i32_138 = arith.constant -2 : i32
    %377 = vector.broadcast %c-2_i32_138 : i32 to vector<1x256xi32>
    %378 = arith.addi %175, %377 : vector<1x256xi32>
    %c16_i32_139 = arith.constant 16 : i32
    %379 = vector.broadcast %c16_i32_139 : i32 to vector<1x256xi32>
    %380 = arith.cmpi slt, %378, %379 : vector<1x256xi32>
    %381 = arith.andi %376, %380 : vector<1x256xi1>
    %cst_140 = arith.constant 0.000000e+00 : f32
    %382 = vector.shape_cast %381 : vector<1x256xi1> to vector<1x256xi1>
    %383 = vector.broadcast %382 : vector<1x256xi1> to vector<4x256xi1>
    %384 = vector.broadcast %cst_140 : f32 to vector<4x256xf32>
    %385 = arith.select %383, %372, %384 : vector<4x256xi1>, vector<4x256xf32>
    %386 = vector.extract_strided_slice %158 {offsets = [0, 49], sizes = [4, 256], strides = [1, 1]} : vector<4x324xf32> to vector<4x256xf32>
    %c-1_i32_141 = arith.constant -1 : i32
    %387 = vector.broadcast %c-1_i32_141 : i32 to vector<1x256xi32>
    %388 = arith.addi %175, %387 : vector<1x256xi32>
    %c0_i32_142 = arith.constant 0 : i32
    %389 = vector.broadcast %c0_i32_142 : i32 to vector<1x256xi32>
    %390 = arith.cmpi sge, %388, %389 : vector<1x256xi32>
    %c-1_i32_143 = arith.constant -1 : i32
    %391 = vector.broadcast %c-1_i32_143 : i32 to vector<1x256xi32>
    %392 = arith.addi %175, %391 : vector<1x256xi32>
    %c16_i32_144 = arith.constant 16 : i32
    %393 = vector.broadcast %c16_i32_144 : i32 to vector<1x256xi32>
    %394 = arith.cmpi slt, %392, %393 : vector<1x256xi32>
    %395 = arith.andi %390, %394 : vector<1x256xi1>
    %cst_145 = arith.constant 0.000000e+00 : f32
    %396 = vector.shape_cast %395 : vector<1x256xi1> to vector<1x256xi1>
    %397 = vector.broadcast %396 : vector<1x256xi1> to vector<4x256xi1>
    %398 = vector.broadcast %cst_145 : f32 to vector<4x256xf32>
    %399 = arith.select %397, %386, %398 : vector<4x256xi1>, vector<4x256xf32>
    %400 = vector.extract_strided_slice %158 {offsets = [0, 50], sizes = [4, 256], strides = [1, 1]} : vector<4x324xf32> to vector<4x256xf32>
    %c0_i32_146 = arith.constant 0 : i32
    %401 = vector.broadcast %c0_i32_146 : i32 to vector<1x256xi32>
    %402 = arith.addi %175, %401 : vector<1x256xi32>
    %c0_i32_147 = arith.constant 0 : i32
    %403 = vector.broadcast %c0_i32_147 : i32 to vector<1x256xi32>
    %404 = arith.cmpi sge, %402, %403 : vector<1x256xi32>
    %c0_i32_148 = arith.constant 0 : i32
    %405 = vector.broadcast %c0_i32_148 : i32 to vector<1x256xi32>
    %406 = arith.addi %175, %405 : vector<1x256xi32>
    %c16_i32_149 = arith.constant 16 : i32
    %407 = vector.broadcast %c16_i32_149 : i32 to vector<1x256xi32>
    %408 = arith.cmpi slt, %406, %407 : vector<1x256xi32>
    %409 = arith.andi %404, %408 : vector<1x256xi1>
    %cst_150 = arith.constant 0.000000e+00 : f32
    %410 = vector.shape_cast %409 : vector<1x256xi1> to vector<1x256xi1>
    %411 = vector.broadcast %410 : vector<1x256xi1> to vector<4x256xi1>
    %412 = vector.broadcast %cst_150 : f32 to vector<4x256xf32>
    %413 = arith.select %411, %400, %412 : vector<4x256xi1>, vector<4x256xf32>
    %414 = vector.extract_strided_slice %158 {offsets = [0, 51], sizes = [4, 256], strides = [1, 1]} : vector<4x324xf32> to vector<4x256xf32>
    %c1_i32_151 = arith.constant 1 : i32
    %415 = vector.broadcast %c1_i32_151 : i32 to vector<1x256xi32>
    %416 = arith.addi %175, %415 : vector<1x256xi32>
    %c0_i32_152 = arith.constant 0 : i32
    %417 = vector.broadcast %c0_i32_152 : i32 to vector<1x256xi32>
    %418 = arith.cmpi sge, %416, %417 : vector<1x256xi32>
    %c1_i32_153 = arith.constant 1 : i32
    %419 = vector.broadcast %c1_i32_153 : i32 to vector<1x256xi32>
    %420 = arith.addi %175, %419 : vector<1x256xi32>
    %c16_i32_154 = arith.constant 16 : i32
    %421 = vector.broadcast %c16_i32_154 : i32 to vector<1x256xi32>
    %422 = arith.cmpi slt, %420, %421 : vector<1x256xi32>
    %423 = arith.andi %418, %422 : vector<1x256xi1>
    %cst_155 = arith.constant 0.000000e+00 : f32
    %424 = vector.shape_cast %423 : vector<1x256xi1> to vector<1x256xi1>
    %425 = vector.broadcast %424 : vector<1x256xi1> to vector<4x256xi1>
    %426 = vector.broadcast %cst_155 : f32 to vector<4x256xf32>
    %427 = arith.select %425, %414, %426 : vector<4x256xi1>, vector<4x256xf32>
    %428 = vector.extract_strided_slice %158 {offsets = [0, 52], sizes = [4, 256], strides = [1, 1]} : vector<4x324xf32> to vector<4x256xf32>
    %c2_i32_156 = arith.constant 2 : i32
    %429 = vector.broadcast %c2_i32_156 : i32 to vector<1x256xi32>
    %430 = arith.addi %175, %429 : vector<1x256xi32>
    %c0_i32_157 = arith.constant 0 : i32
    %431 = vector.broadcast %c0_i32_157 : i32 to vector<1x256xi32>
    %432 = arith.cmpi sge, %430, %431 : vector<1x256xi32>
    %c2_i32_158 = arith.constant 2 : i32
    %433 = vector.broadcast %c2_i32_158 : i32 to vector<1x256xi32>
    %434 = arith.addi %175, %433 : vector<1x256xi32>
    %c16_i32_159 = arith.constant 16 : i32
    %435 = vector.broadcast %c16_i32_159 : i32 to vector<1x256xi32>
    %436 = arith.cmpi slt, %434, %435 : vector<1x256xi32>
    %437 = arith.andi %432, %436 : vector<1x256xi1>
    %cst_160 = arith.constant 0.000000e+00 : f32
    %438 = vector.shape_cast %437 : vector<1x256xi1> to vector<1x256xi1>
    %439 = vector.broadcast %438 : vector<1x256xi1> to vector<4x256xi1>
    %440 = vector.broadcast %cst_160 : f32 to vector<4x256xf32>
    %441 = arith.select %439, %428, %440 : vector<4x256xi1>, vector<4x256xf32>
    %442 = vector.extract_strided_slice %158 {offsets = [0, 64], sizes = [4, 256], strides = [1, 1]} : vector<4x324xf32> to vector<4x256xf32>
    %c-2_i32_161 = arith.constant -2 : i32
    %443 = vector.broadcast %c-2_i32_161 : i32 to vector<1x256xi32>
    %444 = arith.addi %175, %443 : vector<1x256xi32>
    %c0_i32_162 = arith.constant 0 : i32
    %445 = vector.broadcast %c0_i32_162 : i32 to vector<1x256xi32>
    %446 = arith.cmpi sge, %444, %445 : vector<1x256xi32>
    %c-2_i32_163 = arith.constant -2 : i32
    %447 = vector.broadcast %c-2_i32_163 : i32 to vector<1x256xi32>
    %448 = arith.addi %175, %447 : vector<1x256xi32>
    %c16_i32_164 = arith.constant 16 : i32
    %449 = vector.broadcast %c16_i32_164 : i32 to vector<1x256xi32>
    %450 = arith.cmpi slt, %448, %449 : vector<1x256xi32>
    %451 = arith.andi %446, %450 : vector<1x256xi1>
    %cst_165 = arith.constant 0.000000e+00 : f32
    %452 = vector.shape_cast %451 : vector<1x256xi1> to vector<1x256xi1>
    %453 = vector.broadcast %452 : vector<1x256xi1> to vector<4x256xi1>
    %454 = vector.broadcast %cst_165 : f32 to vector<4x256xf32>
    %455 = arith.select %453, %442, %454 : vector<4x256xi1>, vector<4x256xf32>
    %456 = vector.extract_strided_slice %158 {offsets = [0, 65], sizes = [4, 256], strides = [1, 1]} : vector<4x324xf32> to vector<4x256xf32>
    %c-1_i32_166 = arith.constant -1 : i32
    %457 = vector.broadcast %c-1_i32_166 : i32 to vector<1x256xi32>
    %458 = arith.addi %175, %457 : vector<1x256xi32>
    %c0_i32_167 = arith.constant 0 : i32
    %459 = vector.broadcast %c0_i32_167 : i32 to vector<1x256xi32>
    %460 = arith.cmpi sge, %458, %459 : vector<1x256xi32>
    %c-1_i32_168 = arith.constant -1 : i32
    %461 = vector.broadcast %c-1_i32_168 : i32 to vector<1x256xi32>
    %462 = arith.addi %175, %461 : vector<1x256xi32>
    %c16_i32_169 = arith.constant 16 : i32
    %463 = vector.broadcast %c16_i32_169 : i32 to vector<1x256xi32>
    %464 = arith.cmpi slt, %462, %463 : vector<1x256xi32>
    %465 = arith.andi %460, %464 : vector<1x256xi1>
    %cst_170 = arith.constant 0.000000e+00 : f32
    %466 = vector.shape_cast %465 : vector<1x256xi1> to vector<1x256xi1>
    %467 = vector.broadcast %466 : vector<1x256xi1> to vector<4x256xi1>
    %468 = vector.broadcast %cst_170 : f32 to vector<4x256xf32>
    %469 = arith.select %467, %456, %468 : vector<4x256xi1>, vector<4x256xf32>
    %470 = vector.extract_strided_slice %158 {offsets = [0, 66], sizes = [4, 256], strides = [1, 1]} : vector<4x324xf32> to vector<4x256xf32>
    %c0_i32_171 = arith.constant 0 : i32
    %471 = vector.broadcast %c0_i32_171 : i32 to vector<1x256xi32>
    %472 = arith.addi %175, %471 : vector<1x256xi32>
    %c0_i32_172 = arith.constant 0 : i32
    %473 = vector.broadcast %c0_i32_172 : i32 to vector<1x256xi32>
    %474 = arith.cmpi sge, %472, %473 : vector<1x256xi32>
    %c0_i32_173 = arith.constant 0 : i32
    %475 = vector.broadcast %c0_i32_173 : i32 to vector<1x256xi32>
    %476 = arith.addi %175, %475 : vector<1x256xi32>
    %c16_i32_174 = arith.constant 16 : i32
    %477 = vector.broadcast %c16_i32_174 : i32 to vector<1x256xi32>
    %478 = arith.cmpi slt, %476, %477 : vector<1x256xi32>
    %479 = arith.andi %474, %478 : vector<1x256xi1>
    %cst_175 = arith.constant 0.000000e+00 : f32
    %480 = vector.shape_cast %479 : vector<1x256xi1> to vector<1x256xi1>
    %481 = vector.broadcast %480 : vector<1x256xi1> to vector<4x256xi1>
    %482 = vector.broadcast %cst_175 : f32 to vector<4x256xf32>
    %483 = arith.select %481, %470, %482 : vector<4x256xi1>, vector<4x256xf32>
    %484 = vector.extract_strided_slice %158 {offsets = [0, 67], sizes = [4, 256], strides = [1, 1]} : vector<4x324xf32> to vector<4x256xf32>
    %c1_i32_176 = arith.constant 1 : i32
    %485 = vector.broadcast %c1_i32_176 : i32 to vector<1x256xi32>
    %486 = arith.addi %175, %485 : vector<1x256xi32>
    %c0_i32_177 = arith.constant 0 : i32
    %487 = vector.broadcast %c0_i32_177 : i32 to vector<1x256xi32>
    %488 = arith.cmpi sge, %486, %487 : vector<1x256xi32>
    %c1_i32_178 = arith.constant 1 : i32
    %489 = vector.broadcast %c1_i32_178 : i32 to vector<1x256xi32>
    %490 = arith.addi %175, %489 : vector<1x256xi32>
    %c16_i32_179 = arith.constant 16 : i32
    %491 = vector.broadcast %c16_i32_179 : i32 to vector<1x256xi32>
    %492 = arith.cmpi slt, %490, %491 : vector<1x256xi32>
    %493 = arith.andi %488, %492 : vector<1x256xi1>
    %cst_180 = arith.constant 0.000000e+00 : f32
    %494 = vector.shape_cast %493 : vector<1x256xi1> to vector<1x256xi1>
    %495 = vector.broadcast %494 : vector<1x256xi1> to vector<4x256xi1>
    %496 = vector.broadcast %cst_180 : f32 to vector<4x256xf32>
    %497 = arith.select %495, %484, %496 : vector<4x256xi1>, vector<4x256xf32>
    %498 = vector.extract_strided_slice %158 {offsets = [0, 68], sizes = [4, 256], strides = [1, 1]} : vector<4x324xf32> to vector<4x256xf32>
    %c2_i32_181 = arith.constant 2 : i32
    %499 = vector.broadcast %c2_i32_181 : i32 to vector<1x256xi32>
    %500 = arith.addi %175, %499 : vector<1x256xi32>
    %c0_i32_182 = arith.constant 0 : i32
    %501 = vector.broadcast %c0_i32_182 : i32 to vector<1x256xi32>
    %502 = arith.cmpi sge, %500, %501 : vector<1x256xi32>
    %c2_i32_183 = arith.constant 2 : i32
    %503 = vector.broadcast %c2_i32_183 : i32 to vector<1x256xi32>
    %504 = arith.addi %175, %503 : vector<1x256xi32>
    %c16_i32_184 = arith.constant 16 : i32
    %505 = vector.broadcast %c16_i32_184 : i32 to vector<1x256xi32>
    %506 = arith.cmpi slt, %504, %505 : vector<1x256xi32>
    %507 = arith.andi %502, %506 : vector<1x256xi1>
    %cst_185 = arith.constant 0.000000e+00 : f32
    %508 = vector.shape_cast %507 : vector<1x256xi1> to vector<1x256xi1>
    %509 = vector.broadcast %508 : vector<1x256xi1> to vector<4x256xi1>
    %510 = vector.broadcast %cst_185 : f32 to vector<4x256xf32>
    %511 = arith.select %509, %498, %510 : vector<4x256xi1>, vector<4x256xf32>
    %512 = tpu.concatenate %189, %203, %217, %231, %245, %259, %273, %287, %301, %315, %329, %343, %14, %357, %371, %385 in 0 : vector<4x256xf32>, vector<4x256xf32>, vector<4x256xf32>, vector<4x256xf32>, vector<4x256xf32>, vector<4x256xf32>, vector<4x256xf32>, vector<4x256xf32>, vector<4x256xf32>, vector<4x256xf32>, vector<4x256xf32>, vector<4x256xf32>, vector<4x256xf32>, vector<4x256xf32>, vector<4x256xf32>, vector<4x256xf32> -> vector<64x256xf32>
    %513 = tpu.concatenate %399, %413, %427, %441, %455, %469, %483, %497, %511 in 0 : vector<4x256xf32>, vector<4x256xf32>, vector<4x256xf32>, vector<4x256xf32>, vector<4x256xf32>, vector<4x256xf32>, vector<4x256xf32>, vector<4x256xf32>, vector<4x256xf32> -> vector<36x256xf32>
    %514 = tpu.concatenate %512, %513 in 0 : vector<64x256xf32>, vector<36x256xf32> -> vector<100x256xf32>
    %c0_186 = arith.constant 0 : index
    %c0_187 = arith.constant 0 : index
    %515 = vector.load %arg6[%c0_186, %c0_187] : memref<8x100xf32, #tpu.memory_space<vmem>>, vector<8x100xf32>
    %cst_188 = arith.constant dense<0.000000e+00> : vector<8x256xf32>
    %516 = tpu.matmul %515, %514, %cst_188 {dimension_numbers = #tpu.dot_dimension_numbers<[1], [0], [0], [1], [0, 0, 1, 1], [], []>} : vector<8x100xf32>, vector<100x256xf32>, vector<8x256xf32> -> vector<8x256xf32>
    %c0_189 = arith.constant 0 : index
    %c0_190 = arith.constant 0 : index
    %517 = vector.load %arg7[%c0_189, %c0_190] : memref<8x1xf32, #tpu.memory_space<vmem>>, vector<8x1xf32>
    %518 = vector.broadcast %517 : vector<8x1xf32> to vector<8x256xf32>
    %519 = arith.addf %516, %518 : vector<8x256xf32>
    %cst_191 = arith.constant 0.000000e+00 : f32
    %520 = vector.broadcast %cst_191 : f32 to vector<8x256xf32>
    %521 = arith.maximumf %519, %520 : vector<8x256xf32>
    %c0_192 = arith.constant 0 : index
    %c32 = arith.constant 32 : index
    %c0_193 = arith.constant 0 : index
    %522 = vector.load %arg10[%c0_192, %c32, %c0_193] : memref<1x48x256xf32, #tpu.memory_space<vmem>>, vector<1x8x256xf32>
    %523 = vector.shape_cast %522 : vector<1x8x256xf32> to vector<8x256xf32>
    %524 = vector.shape_cast %521 : vector<8x256xf32> to vector<1x8x256xf32>
    tpu.vector_store %arg10[%c0_192, %c32, %c0_193], %524 {strides = array<i32>} : memref<1x48x256xf32, #tpu.memory_space<vmem>>, vector<1x8x256xf32>,
    %cst_194 = arith.constant 0xFF800000 : f32
    %525 = vector.broadcast %cst_194 : f32 to vector<4x17xf32>
    %526 = tpu.concatenate %525, %1, %525 in 1 : vector<4x17xf32>, vector<4x256xf32>, vector<4x17xf32> -> vector<4x290xf32>
    %527 = tpu.iota {dimensions = array<i32: 1>} : vector<1x256xi32>
    %c16_i32_195 = arith.constant 16 : i32
    %c0_i32_196 = arith.constant 0 : i32
    %528 = arith.cmpi eq, %c16_i32_195, %c0_i32_196 : i32
    %c1_i32_197 = arith.constant 1 : i32
    %529 = arith.select %528, %c1_i32_197, %c16_i32_195 : i32
    %530 = vector.broadcast %529 : i32 to vector<1x256xi32>
    %531 = arith.remsi %527, %530 : vector<1x256xi32>
    %c0_i32_198 = arith.constant 0 : i32
    %532 = vector.broadcast %c0_i32_198 : i32 to vector<1x256xi32>
    %533 = arith.cmpi ne, %531, %532 : vector<1x256xi32>
    %c0_i32_199 = arith.constant 0 : i32
    %534 = vector.broadcast %c0_i32_199 : i32 to vector<1x256xi32>
    %535 = arith.cmpi slt, %531, %534 : vector<1x256xi32>
    %c0_i32_200 = arith.constant 0 : i32
    %536 = arith.cmpi slt, %529, %c0_i32_200 : i32
    %537 = vector.broadcast %536 : i1 to vector<1x256xi1>
    %538 = vector.broadcast %537 : vector<1x256xi1> to vector<1x256xi1>
    %539 = arith.xori %535, %538 : vector<1x256xi1>
    %540 = arith.andi %539, %533 : vector<1x256xi1>
    %541 = vector.broadcast %529 : i32 to vector<1x256xi32>
    %542 = arith.addi %531, %541 : vector<1x256xi32>
    %543 = arith.select %540, %542, %531 : vector<1x256xi1>, vector<1x256xi32>
    %544 = vector.extract_strided_slice %526 {offsets = [0, 0], sizes = [4, 256], strides = [1, 1]} : vector<4x290xf32> to vector<4x256xf32>
    %c-1_i32_201 = arith.constant -1 : i32
    %545 = vector.broadcast %c-1_i32_201 : i32 to vector<1x256xi32>
    %546 = arith.addi %543, %545 : vector<1x256xi32>
    %c0_i32_202 = arith.constant 0 : i32
    %547 = vector.broadcast %c0_i32_202 : i32 to vector<1x256xi32>
    %548 = arith.cmpi sge, %546, %547 : vector<1x256xi32>
    %c-1_i32_203 = arith.constant -1 : i32
    %549 = vector.broadcast %c-1_i32_203 : i32 to vector<1x256xi32>
    %550 = arith.addi %543, %549 : vector<1x256xi32>
    %c16_i32_204 = arith.constant 16 : i32
    %551 = vector.broadcast %c16_i32_204 : i32 to vector<1x256xi32>
    %552 = arith.cmpi slt, %550, %551 : vector<1x256xi32>
    %553 = arith.andi %548, %552 : vector<1x256xi1>
    %cst_205 = arith.constant 0xFF800000 : f32
    %554 = vector.shape_cast %553 : vector<1x256xi1> to vector<1x256xi1>
    %555 = vector.broadcast %554 : vector<1x256xi1> to vector<4x256xi1>
    %556 = vector.broadcast %cst_205 : f32 to vector<4x256xf32>
    %557 = arith.select %555, %544, %556 : vector<4x256xi1>, vector<4x256xf32>
    %558 = vector.extract_strided_slice %526 {offsets = [0, 1], sizes = [4, 256], strides = [1, 1]} : vector<4x290xf32> to vector<4x256xf32>
    %c0_i32_206 = arith.constant 0 : i32
    %559 = vector.broadcast %c0_i32_206 : i32 to vector<1x256xi32>
    %560 = arith.addi %543, %559 : vector<1x256xi32>
    %c0_i32_207 = arith.constant 0 : i32
    %561 = vector.broadcast %c0_i32_207 : i32 to vector<1x256xi32>
    %562 = arith.cmpi sge, %560, %561 : vector<1x256xi32>
    %c0_i32_208 = arith.constant 0 : i32
    %563 = vector.broadcast %c0_i32_208 : i32 to vector<1x256xi32>
    %564 = arith.addi %543, %563 : vector<1x256xi32>
    %c16_i32_209 = arith.constant 16 : i32
    %565 = vector.broadcast %c16_i32_209 : i32 to vector<1x256xi32>
    %566 = arith.cmpi slt, %564, %565 : vector<1x256xi32>
    %567 = arith.andi %562, %566 : vector<1x256xi1>
    %cst_210 = arith.constant 0xFF800000 : f32
    %568 = vector.shape_cast %567 : vector<1x256xi1> to vector<1x256xi1>
    %569 = vector.broadcast %568 : vector<1x256xi1> to vector<4x256xi1>
    %570 = vector.broadcast %cst_210 : f32 to vector<4x256xf32>
    %571 = arith.select %569, %558, %570 : vector<4x256xi1>, vector<4x256xf32>
    %572 = vector.extract_strided_slice %526 {offsets = [0, 2], sizes = [4, 256], strides = [1, 1]} : vector<4x290xf32> to vector<4x256xf32>
    %c1_i32_211 = arith.constant 1 : i32
    %573 = vector.broadcast %c1_i32_211 : i32 to vector<1x256xi32>
    %574 = arith.addi %543, %573 : vector<1x256xi32>
    %c0_i32_212 = arith.constant 0 : i32
    %575 = vector.broadcast %c0_i32_212 : i32 to vector<1x256xi32>
    %576 = arith.cmpi sge, %574, %575 : vector<1x256xi32>
    %c1_i32_213 = arith.constant 1 : i32
    %577 = vector.broadcast %c1_i32_213 : i32 to vector<1x256xi32>
    %578 = arith.addi %543, %577 : vector<1x256xi32>
    %c16_i32_214 = arith.constant 16 : i32
    %579 = vector.broadcast %c16_i32_214 : i32 to vector<1x256xi32>
    %580 = arith.cmpi slt, %578, %579 : vector<1x256xi32>
    %581 = arith.andi %576, %580 : vector<1x256xi1>
    %cst_215 = arith.constant 0xFF800000 : f32
    %582 = vector.shape_cast %581 : vector<1x256xi1> to vector<1x256xi1>
    %583 = vector.broadcast %582 : vector<1x256xi1> to vector<4x256xi1>
    %584 = vector.broadcast %cst_215 : f32 to vector<4x256xf32>
    %585 = arith.select %583, %572, %584 : vector<4x256xi1>, vector<4x256xf32>
    %586 = vector.extract_strided_slice %526 {offsets = [0, 16], sizes = [4, 256], strides = [1, 1]} : vector<4x290xf32> to vector<4x256xf32>
    %c-1_i32_216 = arith.constant -1 : i32
    %587 = vector.broadcast %c-1_i32_216 : i32 to vector<1x256xi32>
    %588 = arith.addi %543, %587 : vector<1x256xi32>
    %c0_i32_217 = arith.constant 0 : i32
    %589 = vector.broadcast %c0_i32_217 : i32 to vector<1x256xi32>
    %590 = arith.cmpi sge, %588, %589 : vector<1x256xi32>
    %c-1_i32_218 = arith.constant -1 : i32
    %591 = vector.broadcast %c-1_i32_218 : i32 to vector<1x256xi32>
    %592 = arith.addi %543, %591 : vector<1x256xi32>
    %c16_i32_219 = arith.constant 16 : i32
    %593 = vector.broadcast %c16_i32_219 : i32 to vector<1x256xi32>
    %594 = arith.cmpi slt, %592, %593 : vector<1x256xi32>
    %595 = arith.andi %590, %594 : vector<1x256xi1>
    %cst_220 = arith.constant 0xFF800000 : f32
    %596 = vector.shape_cast %595 : vector<1x256xi1> to vector<1x256xi1>
    %597 = vector.broadcast %596 : vector<1x256xi1> to vector<4x256xi1>
    %598 = vector.broadcast %cst_220 : f32 to vector<4x256xf32>
    %599 = arith.select %597, %586, %598 : vector<4x256xi1>, vector<4x256xf32>
    %600 = vector.extract_strided_slice %526 {offsets = [0, 18], sizes = [4, 256], strides = [1, 1]} : vector<4x290xf32> to vector<4x256xf32>
    %c1_i32_221 = arith.constant 1 : i32
    %601 = vector.broadcast %c1_i32_221 : i32 to vector<1x256xi32>
    %602 = arith.addi %543, %601 : vector<1x256xi32>
    %c0_i32_222 = arith.constant 0 : i32
    %603 = vector.broadcast %c0_i32_222 : i32 to vector<1x256xi32>
    %604 = arith.cmpi sge, %602, %603 : vector<1x256xi32>
    %c1_i32_223 = arith.constant 1 : i32
    %605 = vector.broadcast %c1_i32_223 : i32 to vector<1x256xi32>
    %606 = arith.addi %543, %605 : vector<1x256xi32>
    %c16_i32_224 = arith.constant 16 : i32
    %607 = vector.broadcast %c16_i32_224 : i32 to vector<1x256xi32>
    %608 = arith.cmpi slt, %606, %607 : vector<1x256xi32>
    %609 = arith.andi %604, %608 : vector<1x256xi1>
    %cst_225 = arith.constant 0xFF800000 : f32
    %610 = vector.shape_cast %609 : vector<1x256xi1> to vector<1x256xi1>
    %611 = vector.broadcast %610 : vector<1x256xi1> to vector<4x256xi1>
    %612 = vector.broadcast %cst_225 : f32 to vector<4x256xf32>
    %613 = arith.select %611, %600, %612 : vector<4x256xi1>, vector<4x256xf32>
    %614 = vector.extract_strided_slice %526 {offsets = [0, 32], sizes = [4, 256], strides = [1, 1]} : vector<4x290xf32> to vector<4x256xf32>
    %c-1_i32_226 = arith.constant -1 : i32
    %615 = vector.broadcast %c-1_i32_226 : i32 to vector<1x256xi32>
    %616 = arith.addi %543, %615 : vector<1x256xi32>
    %c0_i32_227 = arith.constant 0 : i32
    %617 = vector.broadcast %c0_i32_227 : i32 to vector<1x256xi32>
    %618 = arith.cmpi sge, %616, %617 : vector<1x256xi32>
    %c-1_i32_228 = arith.constant -1 : i32
    %619 = vector.broadcast %c-1_i32_228 : i32 to vector<1x256xi32>
    %620 = arith.addi %543, %619 : vector<1x256xi32>
    %c16_i32_229 = arith.constant 16 : i32
    %621 = vector.broadcast %c16_i32_229 : i32 to vector<1x256xi32>
    %622 = arith.cmpi slt, %620, %621 : vector<1x256xi32>
    %623 = arith.andi %618, %622 : vector<1x256xi1>
    %cst_230 = arith.constant 0xFF800000 : f32
    %624 = vector.shape_cast %623 : vector<1x256xi1> to vector<1x256xi1>
    %625 = vector.broadcast %624 : vector<1x256xi1> to vector<4x256xi1>
    %626 = vector.broadcast %cst_230 : f32 to vector<4x256xf32>
    %627 = arith.select %625, %614, %626 : vector<4x256xi1>, vector<4x256xf32>
    %628 = vector.extract_strided_slice %526 {offsets = [0, 33], sizes = [4, 256], strides = [1, 1]} : vector<4x290xf32> to vector<4x256xf32>
    %c0_i32_231 = arith.constant 0 : i32
    %629 = vector.broadcast %c0_i32_231 : i32 to vector<1x256xi32>
    %630 = arith.addi %543, %629 : vector<1x256xi32>
    %c0_i32_232 = arith.constant 0 : i32
    %631 = vector.broadcast %c0_i32_232 : i32 to vector<1x256xi32>
    %632 = arith.cmpi sge, %630, %631 : vector<1x256xi32>
    %c0_i32_233 = arith.constant 0 : i32
    %633 = vector.broadcast %c0_i32_233 : i32 to vector<1x256xi32>
    %634 = arith.addi %543, %633 : vector<1x256xi32>
    %c16_i32_234 = arith.constant 16 : i32
    %635 = vector.broadcast %c16_i32_234 : i32 to vector<1x256xi32>
    %636 = arith.cmpi slt, %634, %635 : vector<1x256xi32>
    %637 = arith.andi %632, %636 : vector<1x256xi1>
    %cst_235 = arith.constant 0xFF800000 : f32
    %638 = vector.shape_cast %637 : vector<1x256xi1> to vector<1x256xi1>
    %639 = vector.broadcast %638 : vector<1x256xi1> to vector<4x256xi1>
    %640 = vector.broadcast %cst_235 : f32 to vector<4x256xf32>
    %641 = arith.select %639, %628, %640 : vector<4x256xi1>, vector<4x256xf32>
    %642 = vector.extract_strided_slice %526 {offsets = [0, 34], sizes = [4, 256], strides = [1, 1]} : vector<4x290xf32> to vector<4x256xf32>
    %c1_i32_236 = arith.constant 1 : i32
    %643 = vector.broadcast %c1_i32_236 : i32 to vector<1x256xi32>
    %644 = arith.addi %543, %643 : vector<1x256xi32>
    %c0_i32_237 = arith.constant 0 : i32
    %645 = vector.broadcast %c0_i32_237 : i32 to vector<1x256xi32>
    %646 = arith.cmpi sge, %644, %645 : vector<1x256xi32>
    %c1_i32_238 = arith.constant 1 : i32
    %647 = vector.broadcast %c1_i32_238 : i32 to vector<1x256xi32>
    %648 = arith.addi %543, %647 : vector<1x256xi32>
    %c16_i32_239 = arith.constant 16 : i32
    %649 = vector.broadcast %c16_i32_239 : i32 to vector<1x256xi32>
    %650 = arith.cmpi slt, %648, %649 : vector<1x256xi32>
    %651 = arith.andi %646, %650 : vector<1x256xi1>
    %cst_240 = arith.constant 0xFF800000 : f32
    %652 = vector.shape_cast %651 : vector<1x256xi1> to vector<1x256xi1>
    %653 = vector.broadcast %652 : vector<1x256xi1> to vector<4x256xi1>
    %654 = vector.broadcast %cst_240 : f32 to vector<4x256xf32>
    %655 = arith.select %653, %642, %654 : vector<4x256xi1>, vector<4x256xf32>
    %656 = arith.maximumf %557, %571 : vector<4x256xf32>
    %657 = arith.maximumf %656, %585 : vector<4x256xf32>
    %658 = arith.maximumf %657, %599 : vector<4x256xf32>
    %659 = arith.maximumf %658, %1 : vector<4x256xf32>
    %660 = arith.maximumf %659, %613 : vector<4x256xf32>
    %661 = arith.maximumf %660, %627 : vector<4x256xf32>
    %662 = arith.maximumf %661, %641 : vector<4x256xf32>
    %663 = arith.maximumf %662, %655 : vector<4x256xf32>
    %c0_241 = arith.constant 0 : index
    %c0_242 = arith.constant 0 : index
    %664 = vector.load %arg8[%c0_241, %c0_242] : memref<8x4xf32, #tpu.memory_space<vmem>>, vector<8x4xf32>
    %cst_243 = arith.constant dense<0.000000e+00> : vector<8x256xf32>
    %665 = tpu.matmul %664, %663, %cst_243 {dimension_numbers = #tpu.dot_dimension_numbers<[1], [0], [0], [1], [0, 0, 1, 1], [], []>} : vector<8x4xf32>, vector<4x256xf32>, vector<8x256xf32> -> vector<8x256xf32>
    %c0_244 = arith.constant 0 : index
    %c0_245 = arith.constant 0 : index
    %666 = vector.load %arg9[%c0_244, %c0_245] : memref<8x1xf32, #tpu.memory_space<vmem>>, vector<8x1xf32>
    %667 = vector.broadcast %666 : vector<8x1xf32> to vector<8x256xf32>
    %668 = arith.addf %665, %667 : vector<8x256xf32>
    %cst_246 = arith.constant 0.000000e+00 : f32
    %669 = vector.broadcast %cst_246 : f32 to vector<8x256xf32>
    %670 = arith.maximumf %668, %669 : vector<8x256xf32>
    %c0_247 = arith.constant 0 : index
    %c40 = arith.constant 40 : index
    %c0_248 = arith.constant 0 : index
    %671 = vector.load %arg10[%c0_247, %c40, %c0_248] : memref<1x48x256xf32, #tpu.memory_space<vmem>>, vector<1x8x256xf32>
    %672 = vector.shape_cast %671 : vector<1x8x256xf32> to vector<8x256xf32>
    %673 = vector.shape_cast %670 : vector<8x256xf32> to vector<1x8x256xf32>
    tpu.vector_store %arg10[%c0_247, %c40, %c0_248], %673 {strides = array<i32>} : memref<1x48x256xf32, #tpu.memory_space<vmem>>, vector<1x8x256xf32>,
    return
  }
  func.func @transform_0(%arg0: i32) -> (i32, i32, i32) {
    %c0_i32 = arith.constant 0 : i32
    %c0_i32_0 = arith.constant 0 : i32
    %c0_i32_1 = arith.constant 0 : i32
    return %arg0, %c0_i32, %c0_i32_0 : i32, i32, i32
  }
  func.func @transform_1(%arg0: i32) -> (i32, i32) {
    %c0_i32 = arith.constant 0 : i32
    %c0_i32_0 = arith.constant 0 : i32
    %c0_i32_1 = arith.constant 0 : i32
    return %c0_i32, %c0_i32_0 : i32, i32
  }
  func.func @transform_2(%arg0: i32) -> (i32, i32) {
    %c0_i32 = arith.constant 0 : i32
    %c0_i32_0 = arith.constant 0 : i32
    %c0_i32_1 = arith.constant 0 : i32
    return %c0_i32, %c0_i32_0 : i32, i32
  }
  func.func @transform_3(%arg0: i32) -> (i32, i32) {
    %c0_i32 = arith.constant 0 : i32
    %c0_i32_0 = arith.constant 0 : i32
    %c0_i32_1 = arith.constant 0 : i32
    return %c0_i32, %c0_i32_0 : i32, i32
  }
  func.func @transform_4(%arg0: i32) -> (i32, i32) {
    %c0_i32 = arith.constant 0 : i32
    %c0_i32_0 = arith.constant 0 : i32
    %c0_i32_1 = arith.constant 0 : i32
    return %c0_i32, %c0_i32_0 : i32, i32
  }
  func.func @transform_5(%arg0: i32) -> (i32, i32) {
    %c0_i32 = arith.constant 0 : i32
    %c0_i32_0 = arith.constant 0 : i32
    %c0_i32_1 = arith.constant 0 : i32
    return %c0_i32, %c0_i32_0 : i32, i32
  }
  func.func @transform_6(%arg0: i32) -> (i32, i32) {
    %c0_i32 = arith.constant 0 : i32
    %c0_i32_0 = arith.constant 0 : i32
    %c0_i32_1 = arith.constant 0 : i32
    return %c0_i32, %c0_i32_0 : i32, i32
  }
  func.func @transform_7(%arg0: i32) -> (i32, i32) {
    %c0_i32 = arith.constant 0 : i32
    %c0_i32_0 = arith.constant 0 : i32
    %c0_i32_1 = arith.constant 0 : i32
    return %c0_i32, %c0_i32_0 : i32, i32
  }
  func.func @transform_8(%arg0: i32) -> (i32, i32) {
    %c0_i32 = arith.constant 0 : i32
    %c0_i32_0 = arith.constant 0 : i32
    %c0_i32_1 = arith.constant 0 : i32
    return %c0_i32, %c0_i32_0 : i32, i32
  }
  func.func @transform_9(%arg0: i32) -> (i32, i32, i32) {
    %c0_i32 = arith.constant 0 : i32
    %c0_i32_0 = arith.constant 0 : i32
    %c0_i32_1 = arith.constant 0 : i32
    return %arg0, %c0_i32, %c0_i32_0 : i32, i32, i32
  }
}

</mosaic_0001>

<llo_original>
// kernel: inception_forward.1
$region0: #{inception_forward.1}
  #allocation0 [shape = 'u32[]', space=smem, size = 0x4, offset = 0x4, fixed_abs, tag = 'smem constant byte address 0x4 - core index']
  #allocation1 [shape = 'u32[144,128]{1,0:T(1,128)}', space=vmem, size = 0x12000, scoped, tag = 'internal scratch']
  %s0 = inlined_call_operand.vmem [shape: f32[2,4,256], index: 0, kind: input, shape index: {}]
  %s1 = inlined_call_operand.vmem [shape: f32[28,4], index: 1, kind: input, shape index: {}]
  %s2 = inlined_call_operand.vmem [shape: f32[28,1], index: 2, kind: input, shape index: {}]
  %s3 = inlined_call_operand.vmem [shape: f32[16,72], index: 3, kind: input, shape index: {}]
  %s4 = inlined_call_operand.vmem [shape: f32[16,1], index: 4, kind: input, shape index: {}]
  %s5 = inlined_call_operand.vmem [shape: f32[8,100], index: 5, kind: input, shape index: {}]
  %s6 = inlined_call_operand.vmem [shape: f32[8,1], index: 6, kind: input, shape index: {}]
  %s7 = inlined_call_operand.vmem [shape: f32[8,4], index: 7, kind: input, shape index: {}]
  %s8 = inlined_call_operand.vmem [shape: f32[8,1], index: 8, kind: input, shape index: {}]
  %s9 = inlined_call_operand.vmem [shape: f32[2,48,256], index: 9, kind: output, shape index: {}]
  %s10 = sld [smem:[#allocation0]]
  $region69: #{inception_forward.1} parent=0
    _
  %s12 = ssub.s32 1, %s10
  %s13 = scalar_select 0, %s12, %s10
  loop: start=0, step=1, limit=4
  $region2: #{inception_forward.1} parent=0 // loop_pre_header
    _
  $region3: #{inception_forward.1} parent=0 // loop_header
    %s15 = sphi 0, %s19
    %p16 = scmp.ge.s32.totalorder %s15, 4
    %s25 = sphi 0, %s27
    %s28 = sphi 0, %s25
    %s29 = sphi 0, %s28
    %s45 = sphi 0, %s29
    %s49 = sphi 0, %s49
    %s51 = sphi 0, %s49
    %s52 = sphi 0, %s51
    %s66 = sphi 0, %s52
    %s70 = sphi 0, %s70
    %s72 = sphi 0, %s70
    %s73 = sphi 0, %s72
    %s87 = sphi 0, %s73
    %s91 = sphi 0, %s91
    %s93 = sphi 0, %s91
    %s94 = sphi 0, %s93
    %s108 = sphi 0, %s94
    %s112 = sphi 0, %s112
    %s114 = sphi 0, %s112
    %s115 = sphi 0, %s114
    %s129 = sphi 0, %s115
    %s133 = sphi 0, %s133
    %s135 = sphi 0, %s133
    %s136 = sphi 0, %s135
    %s150 = sphi 0, %s136
    %s154 = sphi 0, %s154
    %s156 = sphi 0, %s154
    %s157 = sphi 0, %s156
    %s171 = sphi 0, %s157
    %s175 = sphi 0, %s175
    %s177 = sphi 0, %s175
    %s178 = sphi 0, %s177
    %s192 = sphi 0, %s178
    %s196 = sphi 0, %s196
    %s198 = sphi 0, %s196
    %s199 = sphi 0, %s198
    %s213 = sphi 0, %s199
    %s219 = sphi 0, %s221
    %s222 = sphi 0, %s219
    %s223 = sphi 0, %s222
    %s239 = sphi 0, %s223
  $region4: #{inception_forward.1} parent=0 // loop_header_branch
    %18 = sbr.rel (%p16) target = $region8
  $region5: #{inception_forward.1} parent=0 // loop_body
    %s20 = ssub.s32 %s15, 1
    %s21 = ssub.s32 %s15, 2
    %s22 = sadd.s32 %s15, 1
    %s23 = ssub.s32 %s15, %s22
    %p24 = scmp.eq.s32.totalorder %s23, 0
    %s26 = sadd.s32 %s25, 1
    %s27 = scalar_select %p24, %s25, %s26
    %p30 = pneg %p24
    %p31 = scmp.eq.s32.totalorder %s15, 1
    %p32 = por %p30, %p31
    %p33 = scmp.ne.s32.totalorder %s25, %s28
    %p34 = scmp.eq.s32.totalorder %s15, 0
    %p35 = por %p33, %p34
    %p36 = scmp.ne.s32.totalorder %s25, %s28
    %p37 = scmp.eq.s32.totalorder %s20, 1
    %p38 = por %p36, %p37
    %p39 = scmp.ne.s32.totalorder %s28, %s29
    %p40 = scmp.eq.s32.totalorder %s20, 0
    %p41 = por %p39, %p40
    %p42 = scmp.ne.s32.totalorder %s28, %s29
    %p43 = scmp.eq.s32.totalorder %s21, 1
    %p44 = por %p42, %p43
    %p46 = scmp.ne.s32.totalorder %s29, %s45
    %p47 = scmp.eq.s32.totalorder %s21, 0
    %p48 = por %p46, %p47
    %s50 = sadd.s32 %s49, 1
    %p53 = scmp.eq.s32.totalorder %s15, 1
    %p54 = scmp.ne.s32.totalorder %s49, %s51
    %p55 = scmp.eq.s32.totalorder %s15, 0
    %p56 = por %p54, %p55
    %p57 = scmp.ne.s32.totalorder %s49, %s51
    %p58 = scmp.eq.s32.totalorder %s20, 1
    %p59 = por %p57, %p58
    %p60 = scmp.ne.s32.totalorder %s51, %s52
    %p61 = scmp.eq.s32.totalorder %s20, 0
    %p62 = por %p60, %p61
    %p63 = scmp.ne.s32.totalorder %s51, %s52
    %p64 = scmp.eq.s32.totalorder %s21, 1
    %p65 = por %p63, %p64
    %p67 = scmp.ne.s32.totalorder %s52, %s66
    %p68 = scmp.eq.s32.totalorder %s21, 0
    %p69 = por %p67, %p68
    %s71 = sadd.s32 %s70, 1
    %p74 = scmp.eq.s32.totalorder %s15, 1
    %p75 = scmp.ne.s32.totalorder %s70, %s72
    %p76 = scmp.eq.s32.totalorder %s15, 0
    %p77 = por %p75, %p76
    %p78 = scmp.ne.s32.totalorder %s70, %s72
    %p79 = scmp.eq.s32.totalorder %s20, 1
    %p80 = por %p78, %p79
    %p81 = scmp.ne.s32.totalorder %s72, %s73
    %p82 = scmp.eq.s32.totalorder %s20, 0
    %p83 = por %p81, %p82
    %p84 = scmp.ne.s32.totalorder %s72, %s73
    %p85 = scmp.eq.s32.totalorder %s21, 1
    %p86 = por %p84, %p85
    %p88 = scmp.ne.s32.totalorder %s73, %s87
    %p89 = scmp.eq.s32.totalorder %s21, 0
    %p90 = por %p88, %p89
    %s92 = sadd.s32 %s91, 1
    %p95 = scmp.eq.s32.totalorder %s15, 1
    %p96 = scmp.ne.s32.totalorder %s91, %s93
    %p97 = scmp.eq.s32.totalorder %s15, 0
    %p98 = por %p96, %p97
    %p99 = scmp.ne.s32.totalorder %s91, %s93
    %p100 = scmp.eq.s32.totalorder %s20, 1
    %p101 = por %p99, %p100
    %p102 = scmp.ne.s32.totalorder %s93, %s94
    %p103 = scmp.eq.s32.totalorder %s20, 0
    %p104 = por %p102, %p103
    %p105 = scmp.ne.s32.totalorder %s93, %s94
    %p106 = scmp.eq.s32.totalorder %s21, 1
    %p107 = por %p105, %p106
    %p109 = scmp.ne.s32.totalorder %s94, %s108
    %p110 = scmp.eq.s32.totalorder %s21, 0
    %p111 = por %p109, %p110
    %s113 = sadd.s32 %s112, 1
    %p116 = scmp.eq.s32.totalorder %s15, 1
    %p117 = scmp.ne.s32.totalorder %s112, %s114
    %p118 = scmp.eq.s32.totalorder %s15, 0
    %p119 = por %p117, %p118
    %p120 = scmp.ne.s32.totalorder %s112, %s114
    %p121 = scmp.eq.s32.totalorder %s20, 1
    %p122 = por %p120, %p121
    %p123 = scmp.ne.s32.totalorder %s114, %s115
    %p124 = scmp.eq.s32.totalorder %s20, 0
    %p125 = por %p123, %p124
    %p126 = scmp.ne.s32.totalorder %s114, %s115
    %p127 = scmp.eq.s32.totalorder %s21, 1
    %p128 = por %p126, %p127
    %p130 = scmp.ne.s32.totalorder %s115, %s129
    %p131 = scmp.eq.s32.totalorder %s21, 0
    %p132 = por %p130, %p131
    %s134 = sadd.s32 %s133, 1
    %p137 = scmp.eq.s32.totalorder %s15, 1
    %p138 = scmp.ne.s32.totalorder %s133, %s135
    %p139 = scmp.eq.s32.totalorder %s15, 0
    %p140 = por %p138, %p139
    %p141 = scmp.ne.s32.totalorder %s133, %s135
    %p142 = scmp.eq.s32.totalorder %s20, 1
    %p143 = por %p141, %p142
    %p144 = scmp.ne.s32.totalorder %s135, %s136
    %p145 = scmp.eq.s32.totalorder %s20, 0
    %p146 = por %p144, %p145
    %p147 = scmp.ne.s32.totalorder %s135, %s136
    %p148 = scmp.eq.s32.totalorder %s21, 1
    %p149 = por %p147, %p148
    %p151 = scmp.ne.s32.totalorder %s136, %s150
    %p152 = scmp.eq.s32.totalorder %s21, 0
    %p153 = por %p151, %p152
    %s155 = sadd.s32 %s154, 1
    %p158 = scmp.eq.s32.totalorder %s15, 1
    %p159 = scmp.ne.s32.totalorder %s154, %s156
    %p160 = scmp.eq.s32.totalorder %s15, 0
    %p161 = por %p159, %p160
    %p162 = scmp.ne.s32.totalorder %s154, %s156
    %p163 = scmp.eq.s32.totalorder %s20, 1
    %p164 = por %p162, %p163
    %p165 = scmp.ne.s32.totalorder %s156, %s157
    %p166 = scmp.eq.s32.totalorder %s20, 0
    %p167 = por %p165, %p166
    %p168 = scmp.ne.s32.totalorder %s156, %s157
    %p169 = scmp.eq.s32.totalorder %s21, 1
    %p170 = por %p168, %p169
    %p172 = scmp.ne.s32.totalorder %s157, %s171
    %p173 = scmp.eq.s32.totalorder %s21, 0
    %p174 = por %p172, %p173
    %s176 = sadd.s32 %s175, 1
    %p179 = scmp.eq.s32.totalorder %s15, 1
    %p180 = scmp.ne.s32.totalorder %s175, %s177
    %p181 = scmp.eq.s32.totalorder %s15, 0
    %p182 = por %p180, %p181
    %p183 = scmp.ne.s32.totalorder %s175, %s177
    %p184 = scmp.eq.s32.totalorder %s20, 1
    %p185 = por %p183, %p184
    %p186 = scmp.ne.s32.totalorder %s177, %s178
    %p187 = scmp.eq.s32.totalorder %s20, 0
    %p188 = por %p186, %p187
    %p189 = scmp.ne.s32.totalorder %s177, %s178
    %p190 = scmp.eq.s32.totalorder %s21, 1
    %p191 = por %p189, %p190
    %p193 = scmp.ne.s32.totalorder %s178, %s192
    %p194 = scmp.eq.s32.totalorder %s21, 0
    %p195 = por %p193, %p194
    %s197 = sadd.s32 %s196, 1
    %p200 = scmp.eq.s32.totalorder %s15, 1
    %p201 = scmp.ne.s32.totalorder %s196, %s198
    %p202 = scmp.eq.s32.totalorder %s15, 0
    %p203 = por %p201, %p202
    %p204 = scmp.ne.s32.totalorder %s196, %s198
    %p205 = scmp.eq.s32.totalorder %s20, 1
    %p206 = por %p204, %p205
    %p207 = scmp.ne.s32.totalorder %s198, %s199
    %p208 = scmp.eq.s32.totalorder %s20, 0
    %p209 = por %p207, %p208
    %p210 = scmp.ne.s32.totalorder %s198, %s199
    %p211 = scmp.eq.s32.totalorder %s21, 1
    %p212 = por %p210, %p211
    %p214 = scmp.ne.s32.totalorder %s199, %s213
    %p215 = scmp.eq.s32.totalorder %s21, 0
    %p216 = por %p214, %p215
    %s217 = ssub.s32 %s15, %s22
    %p218 = scmp.eq.s32.totalorder %s217, 0
    %s220 = sadd.s32 %s219, 1
    %s221 = scalar_select %p218, %s219, %s220
    %p224 = pneg %p218
    %p225 = scmp.eq.s32.totalorder %s15, 1
    %p226 = por %p224, %p225
    %p227 = scmp.ne.s32.totalorder %s219, %s222
    %p228 = scmp.eq.s32.totalorder %s15, 0
    %p229 = por %p227, %p228
    %p230 = scmp.ne.s32.totalorder %s219, %s222
    %p231 = scmp.eq.s32.totalorder %s20, 1
    %p232 = por %p230, %p231
    %p233 = scmp.ne.s32.totalorder %s222, %s223
    %p234 = scmp.eq.s32.totalorder %s20, 0
    %p235 = por %p233, %p234
    %p236 = scmp.ne.s32.totalorder %s222, %s223
    %p237 = scmp.eq.s32.totalorder %s21, 1
    %p238 = por %p236, %p237
    %p240 = scmp.ne.s32.totalorder %s223, %s239
    %p241 = scmp.eq.s32.totalorder %s21, 0
    %p242 = por %p240, %p241
    %p243 = scmp.le.s32.totalorder 1, %s15
    %p244 = scmp.lt.s32.totalorder %s15, 3
    %p245 = pnand %p243, %p244
    %p246 = pneg %p245
    // Predicated region
    $region9: #{inception_forward.1} parent=5 // pred_check
      _
    $region10: #{inception_forward.1} parent=5 // pred_check_branch
      %248 = sbr.rel (%p245) target = $region12
    $region11: #{inception_forward.1} parent=5 // pred_region
      %s249 = ssub.s32 %s15, 1
      // Predicated region
      $region13: #{inception_forward.1} parent=11 // pred_check
        %p250 = pneg %p62
      $region14: #{inception_forward.1} parent=11 // pred_check_branch
        %252 = sbr.rel (%p250) target = $region16
      $region15: #{inception_forward.1} parent=11 // pred_region
        _
      $region16: #{inception_forward.1} parent=11 // pred_fallthru
        _
      // Predicated region
      $region17: #{inception_forward.1} parent=11 // pred_check
        %p253 = pneg %p83
      $region18: #{inception_forward.1} parent=11 // pred_check_branch
        %255 = sbr.rel (%p253) target = $region20
      $region19: #{inception_forward.1} parent=11 // pred_region
        _
      $region20: #{inception_forward.1} parent=11 // pred_fallthru
        _
      // Predicated region
      $region21: #{inception_forward.1} parent=11 // pred_check
        %p256 = pneg %p104
      $region22: #{inception_forward.1} parent=11 // pred_check_branch
        %258 = sbr.rel (%p256) target = $region24
      $region23: #{inception_forward.1} parent=11 // pred_region
        _
      $region24: #{inception_forward.1} parent=11 // pred_fallthru
        _
      // Predicated region
      $region25: #{inception_forward.1} parent=11 // pred_check
        %p259 = pneg %p125
      $region26: #{inception_forward.1} parent=11 // pred_check_branch
        %261 = sbr.rel (%p259) target = $region28
      $region27: #{inception_forward.1} parent=11 // pred_region
        _
      $region28: #{inception_forward.1} parent=11 // pred_fallthru
        _
      // Predicated region
      $region29: #{inception_forward.1} parent=11 // pred_check
        %p262 = pneg %p146
      $region30: #{inception_forward.1} parent=11 // pred_check_branch
        %264 = sbr.rel (%p262) target = $region32
      $region31: #{inception_forward.1} parent=11 // pred_region
        _
      $region32: #{inception_forward.1} parent=11 // pred_fallthru
        _
      // Predicated region
      $region33: #{inception_forward.1} parent=11 // pred_check
        %p265 = pneg %p167
      $region34: #{inception_forward.1} parent=11 // pred_check_branch
        %267 = sbr.rel (%p265) target = $region36
      $region35: #{inception_forward.1} parent=11 // pred_region
        _
      $region36: #{inception_forward.1} parent=11 // pred_fallthru
        _
      // Predicated region
      $region37: #{inception_forward.1} parent=11 // pred_check
        %p268 = pneg %p188
      $region38: #{inception_forward.1} parent=11 // pred_check_branch
        %270 = sbr.rel (%p268) target = $region40
      $region39: #{inception_forward.1} parent=11 // pred_region
        _
      $region40: #{inception_forward.1} parent=11 // pred_fallthru
        _
      // Predicated region
      $region41: #{inception_forward.1} parent=11 // pred_check
        %p271 = pneg %p209
      $region42: #{inception_forward.1} parent=11 // pred_check_branch
        %273 = sbr.rel (%p271) target = $region44
      $region43: #{inception_forward.1} parent=11 // pred_region
        _
      $region44: #{inception_forward.1} parent=11 // pred_fallthru
        _
    $region12: #{inception_forward.1} parent=5 // pred_fallthru
      _
    %p274 = scmp.lt.s32.totalorder %s15, 2
    // Predicated region
    $region45: #{inception_forward.1} parent=5 // pred_check
      %p275 = pneg %p274
    $region46: #{inception_forward.1} parent=5 // pred_check_branch
      %277 = sbr.rel (%p275) target = $region48
    $region47: #{inception_forward.1} parent=5 // pred_region
      // Predicated region
      $region49: #{inception_forward.1} parent=47 // pred_check
        %p278 = pneg %p35
      $region50: #{inception_forward.1} parent=47 // pred_check_branch
        %280 = sbr.rel (%p278) target = $region52
      $region51: #{inception_forward.1} parent=47 // pred_region
        %p281 = scmp.lt.s32.totalorder %s15, 1
        %s282 = scalar_select %p281, %s15, 1
        %s283 = smul.addr %s282, 2
        %s284 = smul.addr %s283, 4
        %s285 = scalar_lea.vmem %s0, %s284
      $region52: #{inception_forward.1} parent=47 // pred_fallthru
        _
    $region48: #{inception_forward.1} parent=5 // pred_fallthru
      _
    %p286 = scmp.le.s32.totalorder 1, %s15
    %p287 = scmp.lt.s32.totalorder %s15, 3
    %p288 = pnand %p286, %p287
    %p289 = pneg %p288
    // Predicated region
    $region53: #{inception_forward.1} parent=5 // pred_check
      _
    $region54: #{inception_forward.1} parent=5 // pred_check_branch
      %291 = sbr.rel (%p288) target = $region56
    $region55: #{inception_forward.1} parent=5 // pred_region
      %s292 = ssub.s32 %s15, 1
      %p293 = scmp.lt.s32.totalorder %s20, 1
      %s294 = scalar_select %p293, %s20, 1
      %s295 = smul.addr %s294, 2
      %s296 = smul.addr %s295, 4
      %s297 = scalar_lea.vmem %s0, %s296
      %p298 = pneg %p41
      %p299 = pneg %p38
      %p300 = pneg %p62
      %p301 = pneg %p59
      %p302 = pneg %p83
      %p303 = pneg %p80
      %p304 = pneg %p104
      %p305 = pneg %p101
      %p306 = pneg %p125
      %p307 = pneg %p122
      %p308 = pneg %p146
      %p309 = pneg %p143
      %p310 = pneg %p167
      %p311 = pneg %p164
      %p312 = pneg %p188
      %p313 = pneg %p185
      %p314 = pneg %p209
      %p315 = pneg %p206
      %p316 = pneg %p235
      %p317 = pneg %p232
      %p318 = scmp.lt.s32.totalorder %s20, 1
      %s319 = scalar_select %p318, %s20, 1
      %s320 = smul.addr %s319, 12
      %s321 = smul.addr %s320, 8
      %s322 = scalar_lea.vmem %s9, %s321
      %p323 = scmp.lt.s32.totalorder %s20, 1
      %s324 = scalar_select %p323, %s20, 1
      %s325 = smul.addr %s324, 2
      %s326 = smul.addr %s325, 4
      %s327 = scalar_lea.vmem %s0, %s326
      %p328 = scmp.lt.s32.totalorder %s20, 1
      %s329 = scalar_select %p328, %s20, 1
      %s330 = smul.addr %s329, 12
      %s331 = smul.addr %s330, 8
      %s332 = scalar_lea.vmem %s9, %s331
      %v333 = vld [vmem:[%s327] sm:$0xff]
      %v334 = vld [vmem:[%s1] sm:$0xff]
      %v335 = vld [vmem:[%s1 + $0x8] sm:$0xff]
      %v336 = vld [vmem:[%s1 + $0x10] sm:$0xff]
      %v337 = vld [vmem:[%s1 + $0x18] sm:$0xf]
      %v338 = vld [vmem:[%s2] sm:$0xff]
      %v339 = vld [vmem:[%s2 + $0x8] sm:$0xff]
      %v340 = vld [vmem:[%s2 + $0x10] sm:$0xff]
      %v341 = vld [vmem:[%s2 + $0x18] sm:$0xf]
      %343 = vset.pattern.permute.xlu0 0
      %344 = vperm.xlu0 %343, %v338
      %v345 = vpop.permute.xlu0 %344
      %348 = vset.pattern.permute.xlu0 0
      %349 = vperm.xlu0 %348, %v339
      %v350 = vpop.permute.xlu0 %349
      %353 = vset.pattern.permute.xlu0 0
      %354 = vperm.xlu0 %353, %v340
      %v355 = vpop.permute.xlu0 %354
      %358 = vset.pattern.permute.xlu0 0
      %359 = vperm.xlu0 %358, %v341
      %v360 = vpop.permute.xlu0 %359
      %v363 = vcombine.high %v333, %v333
      %vm364 = vcmask 31744
      %v366 = vsel %vm364, %v334, 0
      %v369 = vsel %vm364, %v335, 0
      %v372 = vsel %vm364, %v336, 0
      %v375 = vsel %vm364, %v337, 0
      %vm377 = vcmask 1043456
      %v378 = vsel %vm377, %v333, 0
      %v380 = vsel %vm377, %v363, 0
      %382 = vmatprep.subr.mxu0 0.0
      %383 = vmatpush1.msra.mxu0 0.0
      %384 = vmatprep.subr.mxu0 0.0
      %385 = vmatpush1.msra.mxu0 0.0
      %386 = vmatprep.subr.mxu0 0.0
      %387 = vmatpush1.msra.mxu0 0.0
      %388 = vmatprep.subr.mxu0 0.0
      %389 = vmatpush1.msra.mxu0 0.0
      %390 = vmatprep.subr.mxu0 0.0
      %391 = vmatpush1.msra.mxu0 0.0
      %392 = vmatprep.subr.mxu0 0.0
      %393 = vmatpush1.msra.mxu0 0.0
      %394 = vmatprep.subr.mxu0 0.0
      %395 = vmatpush1.msra.mxu0 0.0
      %396 = vmatprep.subr.mxu0 0.0
      %397 = vmatpush1.msra.mxu0 0.0
      %398 = vmatprep.subr.mxu0 0.0
      %399 = vmatpush1.msra.mxu0 0.0
      %400 = vmatprep.subr.mxu0 0.0
      %401 = vmatpush1.msra.mxu0 0.0
      %402 = vmatprep.subr.mxu0 0.0
      %403 = vmatpush1.msra.mxu0 0.0
      %404 = vmatprep.subr.mxu0 0.0
      %405 = vmatpush1.msra.mxu0 0.0
      %406 = vmatprep.subr.mxu0 0.0
      %407 = vmatpush1.msra.mxu0 0.0
      %408 = vmatprep.subr.mxu0 0.0
      %409 = vmatpush1.msra.mxu0 0.0
      %410 = vmatprep.subr.mxu0 0.0
      %411 = vmatpush1.msra.mxu0 0.0
      %412 = vmatprep.subr.mxu0 %v380
      %413 = vmatpush1.msra.mxu0 %v378
      %414 = vmatprep.subr.mxu0 0.0
      %415 = vmatpush2.msra.mxu0 0.0
      %416 = vmatprep.subr.mxu0 0.0
      %417 = vmatpush2.msra.mxu0 0.0
      %418 = vmatprep.subr.mxu0 0.0
      %419 = vmatpush2.msra.mxu0 0.0
      %420 = vmatprep.subr.mxu0 0.0
      %421 = vmatpush2.msra.mxu0 0.0
      %422 = vmatprep.subr.mxu0 0.0
      %423 = vmatpush2.msra.mxu0 0.0
      %424 = vmatprep.subr.mxu0 0.0
      %425 = vmatpush2.msra.mxu0 0.0
      %426 = vmatprep.subr.mxu0 0.0
      %427 = vmatpush2.msra.mxu0 0.0
      %428 = vmatprep.subr.mxu0 0.0
      %429 = vmatpush2.msra.mxu0 0.0
      %430 = vmatprep.subr.mxu0 0.0
      %431 = vmatpush2.msra.mxu0 0.0
      %432 = vmatprep.subr.mxu0 0.0
      %433 = vmatpush2.msra.mxu0 0.0
      %434 = vmatprep.subr.mxu0 0.0
      %435 = vmatpush2.msra.mxu0 0.0
      %436 = vmatprep.subr.mxu0 0.0
      %437 = vmatpush2.msra.mxu0 0.0
      %438 = vmatprep.subr.mxu0 0.0
      %439 = vmatpush2.msra.mxu0 0.0
      %440 = vmatprep.subr.mxu0 0.0
      %441 = vmatpush2.msra.mxu0 0.0
      %442 = vmatprep.subr.mxu0 0.0
      %443 = vmatpush2.msra.mxu0 0.0
      %444 = vmatprep.subr.mxu0 0.0
      %445 = vmatpush2.msra.mxu0 0.0
      %446 = vmatprep.mubr.f32.mxu0 0.0
      %447 = vmatmul.mubr.f32.gmra.mxu0 %v366
      %v448 = vpop.f32.mrf.mxu0
      %v449 = vadd.f32 %v345, %v448
      %v450 = vpop.f32.mrf.mxu0
      %v451 = vadd.f32 %v345, %v450
      %452 = vmatprep.mubr.f32.mxu0 0.0
      %453 = vmatmul.mubr.f32.gmra.mxu0 %v369
      %v454 = vpop.f32.mrf.mxu0
      %v455 = vadd.f32 %v350, %v454
      %v456 = vpop.f32.mrf.mxu0
      %v457 = vadd.f32 %v350, %v456
      %458 = vmatprep.mubr.f32.mxu0 0.0
      %459 = vmatmul.mubr.f32.gmra.mxu0 %v372
      %v460 = vpop.f32.mrf.mxu0
      %v461 = vadd.f32 %v355, %v460
      %v462 = vpop.f32.mrf.mxu0
      %v463 = vadd.f32 %v355, %v462
      %464 = vmatprep.mubr.f32.mxu0 0.0
      %465 = vmatmul.mubr.f32.gmra.mxu0 %v375
      %v466 = vpop.f32.mrf.mxu0
      %v467 = vadd.f32 %v360, %v466
      %v468 = vpop.f32.mrf.mxu0
      %v469 = vadd.f32 %v360, %v468
      %470 = vdwg.mxu0
      %v471 = vmax.f32 %v449, 0.0
      %v472 = vmax.f32 %v451, 0.0
      %v473 = vmax.f32 %v455, 0.0
      %v474 = vmax.f32 %v457, 0.0
      %v475 = vmax.f32 %v461, 0.0
      %v476 = vmax.f32 %v463, 0.0
      %v477 = vmax.f32 %v467, 0.0
      %v478 = vmax.f32 %v469, 0.0
      %479 = vst [vmem:[%s332] sm:$0xff] %v471
      %480 = vst [vmem:[%s332 + $0x8] sm:$0xff] %v472
      %481 = vst [vmem:[%s332 + $0x10] sm:$0xff] %v473
      %482 = vst [vmem:[%s332 + $0x18] sm:$0xff] %v474
      %485 = vrot.lane.b32.xlu0 %v475, 17
      %v486 = vpop.permute.xlu0 %485
      %487 = vrot.lane.b32.xlu0 %v476, 17
      %v488 = vpop.permute.xlu0 %487
      %vm489 = vcmask 138240
      %v490 = vsel %vm489, %v486, %v488
      %v494 = vsel %vm489, 0.0, %v486
      %v495 = vsel %vm489, %v488, 0.0
      %v496 = vlaneseq
      %v497 = vand.u32 %v496, 127
      %v498 = vadd.s32 %v497, 128
      %vm499 = vcmp.lt.s32.totalorder %v497, 0
      %v500 = vsub.s32 0, %v497
      %v501 = vsel %vm499, %v500, %v497
      %v502 = vshrl.u32 %v501, 4
      %v503 = vand.u32 %v501, 15
      %v504 = vsub.s32 0, %v503
      %v505 = vsel %vm499, %v504, %v503
      %vm506 = vcmp.lt.s32.totalorder %v498, 0
      %v507 = vsub.s32 0, %v498
      %v508 = vsel %vm506, %v507, %v498
      %v509 = vshrl.u32 %v508, 4
      %v510 = vand.u32 %v508, 15
      %v511 = vsub.s32 0, %v510
      %v512 = vsel %vm506, %v511, %v510
      %vm513 = vcmp.ne.s32.totalorder %v505, 0
      %vm514 = vcmp.ne.s32.totalorder %v512, 0
      %vm515 = vcmp.lt.s32.totalorder %v505, 0
      %vm516 = vcmp.lt.s32.totalorder %v512, 0
      %vm517 = vmand %vm515, %vm513
      %vm518 = vmand %vm516, %vm514
      %v519 = vadd.s32 %v505, 16
      %v520 = vadd.s32 %v512, 16
      %v521 = vsel %vm517, %v519, %v505
      %v522 = vsel %vm518, %v520, %v512
      %v523 = vadd.s32 %v521, 4294967295
      %v524 = vadd.s32 %v522, 4294967295
      %vm525 = vcmp.ge.s32.totalorder %v523, 0
      %vm526 = vcmp.ge.s32.totalorder %v524, 0
      %vm527 = vcmp.lt.s32.totalorder %v523, 16
      %vm528 = vcmp.lt.s32.totalorder %v524, 16
      %vm529 = vmand %vm525, %vm527
      %vm530 = vmand %vm526, %vm528
      %v531 = vsel %vm529, 1, 0
      %v532 = vsel %vm530, 1, 0
      %vm533 = vcmp.eq.s32.totalorder %v531, 1
      %vm534 = vcmp.eq.s32.totalorder %v532, 1
      %v535 = vsel %vm533, %v494, 0.0
      %v536 = vsel %vm534, %v490, 0.0
      %vm537 = vcmp.ge.s32.totalorder %v521, 0
      %vm538 = vcmp.ge.s32.totalorder %v522, 0
      %vm539 = vcmp.lt.s32.totalorder %v521, 16
      %vm540 = vcmp.lt.s32.totalorder %v522, 16
      %vm541 = vmand %vm537, %vm539
      %vm542 = vmand %vm538, %vm540
      %v543 = vsel %vm541, 1, 0
      %v544 = vsel %vm542, 1, 0
      %vm545 = vcmp.eq.s32.totalorder %v543, 1
      %vm546 = vcmp.eq.s32.totalorder %v544, 1
      %549 = vrot.lane.b32.xlu0 %v494, 127
      %v550 = vpop.permute.xlu0 %549
      %551 = vrot.lane.b32.xlu0 %v490, 127
      %v552 = vpop.permute.xlu0 %551
      %553 = vrot.lane.b32.xlu0 %v495, 127
      %v554 = vpop.permute.xlu0 %553
      %vm555 = vcmask 1039360
      %v556 = vsel %vm555, %v550, %v552
      %v557 = vsel %vm555, %v552, %v554
      %v560 = vsel %vm545, %v556, 0.0
      %v561 = vsel %vm546, %v557, 0.0
      %v562 = vadd.s32 %v521, 1
      %v563 = vadd.s32 %v522, 1
      %vm564 = vcmp.ge.s32.totalorder %v562, 0
      %vm565 = vcmp.ge.s32.totalorder %v563, 0
      %vm566 = vcmp.lt.s32.totalorder %v562, 16
      %vm567 = vcmp.lt.s32.totalorder %v563, 16
      %vm568 = vmand %vm564, %vm566
      %vm569 = vmand %vm565, %vm567
      %v570 = vsel %vm568, 1, 0
      %v571 = vsel %vm569, 1, 0
      %vm572 = vcmp.eq.s32.totalorder %v570, 1
      %vm573 = vcmp.eq.s32.totalorder %v571, 1
      %574 = vrot.lane.b32.xlu0 %v494, 126
      %v575 = vpop.permute.xlu0 %574
      %576 = vrot.lane.b32.xlu0 %v490, 126
      %v577 = vpop.permute.xlu0 %576
      %578 = vrot.lane.b32.xlu0 %v495, 126
      %v579 = vpop.permute.xlu0 %578
      %vm580 = vcmask 1031168
      %v581 = vsel %vm580, %v575, %v577
      %v582 = vsel %vm580, %v577, %v579
      %v585 = vsel %vm572, %v581, 0.0
      %v586 = vsel %vm573, %v582, 0.0
      %587 = vrot.lane.b32.xlu0 %v494, 112
      %v588 = vpop.permute.xlu0 %587
      %589 = vrot.lane.b32.xlu0 %v490, 112
      %v590 = vpop.permute.xlu0 %589
      %591 = vrot.lane.b32.xlu0 %v495, 112
      %v592 = vpop.permute.xlu0 %591
      %vm593 = vcmask 916480
      %v594 = vsel %vm593, %v588, %v590
      %v595 = vsel %vm593, %v590, %v592
      %v598 = vsel %vm533, %v594, 0.0
      %v599 = vsel %vm534, %v595, 0.0
      %600 = vrot.lane.b32.xlu0 %v494, 110
      %v601 = vpop.permute.xlu0 %600
      %602 = vrot.lane.b32.xlu0 %v490, 110
      %v603 = vpop.permute.xlu0 %602
      %604 = vrot.lane.b32.xlu0 %v495, 110
      %v605 = vpop.permute.xlu0 %604
      %vm606 = vcmask 900096
      %v607 = vsel %vm606, %v601, %v603
      %v608 = vsel %vm606, %v603, %v605
      %v611 = vsel %vm572, %v607, 0.0
      %v612 = vsel %vm573, %v608, 0.0
      %613 = vrot.lane.b32.xlu0 %v494, 96
      %v614 = vpop.permute.xlu0 %613
      %615 = vrot.lane.b32.xlu0 %v490, 96
      %v616 = vpop.permute.xlu0 %615
      %617 = vrot.lane.b32.xlu0 %v495, 96
      %v618 = vpop.permute.xlu0 %617
      %vm619 = vcmask 785408
      %v620 = vsel %vm619, %v614, %v616
      %v621 = vsel %vm619, %v616, %v618
      %v624 = vsel %vm533, %v620, 0.0
      %v625 = vsel %vm534, %v621, 0.0
      %626 = vrot.lane.b32.xlu0 %v494, 95
      %v627 = vpop.permute.xlu0 %626
      %628 = vrot.lane.b32.xlu0 %v490, 95
      %v629 = vpop.permute.xlu0 %628
      %630 = vrot.lane.b32.xlu0 %v495, 95
      %v631 = vpop.permute.xlu0 %630
      %vm632 = vcmask 777216
      %v633 = vsel %vm632, %v627, %v629
      %v634 = vsel %vm632, %v629, %v631
      %v637 = vsel %vm545, %v633, 0.0
      %v638 = vsel %vm546, %v634, 0.0
      %639 = vrot.lane.b32.xlu0 %v494, 94
      %v640 = vpop.permute.xlu0 %639
      %641 = vrot.lane.b32.xlu0 %v490, 94
      %v642 = vpop.permute.xlu0 %641
      %643 = vrot.lane.b32.xlu0 %v495, 94
      %v644 = vpop.permute.xlu0 %643
      %vm645 = vcmask 769024
      %v646 = vsel %vm645, %v640, %v642
      %v647 = vsel %vm645, %v642, %v644
      %v650 = vsel %vm572, %v646, 0.0
      %v651 = vsel %vm573, %v647, 0.0
      %v652 = vld [vmem:[%s3] sm:$0xff]
      %v653 = vld [vmem:[%s3 + $0x8] sm:$0xff]
      %v654 = vld [vmem:[%s4] sm:$0xff]
      %v655 = vld [vmem:[%s4 + $0x8] sm:$0xff]
      %657 = vset.pattern.permute.xlu0 0
      %658 = vperm.xlu0 %657, %v654
      %v659 = vpop.permute.xlu0 %658
      %662 = vset.pattern.permute.xlu0 0
      %663 = vperm.xlu0 %662, %v655
      %v664 = vpop.permute.xlu0 %663
      %vm666 = vcmask 588800
      %v668 = vsel %vm666, %v652, 0
      %v671 = vsel %vm666, %v653, 0
      %673 = vmatprep.subr.mxu0 0.0
      %674 = vmatpush1.msra.mxu0 0.0
      %675 = vmatprep.subr.mxu0 0.0
      %676 = vmatpush1.msra.mxu0 0.0
      %677 = vmatprep.subr.mxu0 0.0
      %678 = vmatpush1.msra.mxu0 0.0
      %679 = vmatprep.subr.mxu0 0.0
      %680 = vmatpush1.msra.mxu0 0.0
      %681 = vmatprep.subr.mxu0 0.0
      %682 = vmatpush1.msra.mxu0 0.0
      %683 = vmatprep.subr.mxu0 0.0
      %684 = vmatpush1.msra.mxu0 0.0
      %685 = vmatprep.subr.mxu0 0.0
      %686 = vmatpush1.msra.mxu0 0.0
      %687 = vmatprep.subr.mxu0 %v651
      %688 = vmatpush1.msra.mxu0 %v650
      %689 = vmatprep.subr.mxu0 %v638
      %690 = vmatpush1.msra.mxu0 %v637
      %691 = vmatprep.subr.mxu0 %v625
      %692 = vmatpush1.msra.mxu0 %v624
      %693 = vmatprep.subr.mxu0 %v612
      %694 = vmatpush1.msra.mxu0 %v611
      %695 = vmatprep.subr.mxu0 %v476
      %696 = vmatpush1.msra.mxu0 %v475
      %697 = vmatprep.subr.mxu0 %v599
      %698 = vmatpush1.msra.mxu0 %v598
      %699 = vmatprep.subr.mxu0 %v586
      %700 = vmatpush1.msra.mxu0 %v585
      %701 = vmatprep.subr.mxu0 %v561
      %702 = vmatpush1.msra.mxu0 %v560
      %703 = vmatprep.subr.mxu0 %v536
      %704 = vmatpush1.msra.mxu0 %v535
      %705 = vmatprep.subr.mxu0 0.0
      %706 = vmatpush2.msra.mxu0 0.0
      %707 = vmatprep.subr.mxu0 0.0
      %708 = vmatpush2.msra.mxu0 0.0
      %709 = vmatprep.subr.mxu0 0.0
      %710 = vmatpush2.msra.mxu0 0.0
      %711 = vmatprep.subr.mxu0 0.0
      %712 = vmatpush2.msra.mxu0 0.0
      %713 = vmatprep.subr.mxu0 0.0
      %714 = vmatpush2.msra.mxu0 0.0
      %715 = vmatprep.subr.mxu0 0.0
      %716 = vmatpush2.msra.mxu0 0.0
      %717 = vmatprep.subr.mxu0 0.0
      %718 = vmatpush2.msra.mxu0 0.0
      %719 = vmatprep.subr.mxu0 0.0
      %720 = vmatpush2.msra.mxu0 0.0
      %721 = vmatprep.subr.mxu0 0.0
      %722 = vmatpush2.msra.mxu0 0.0
      %723 = vmatprep.subr.mxu0 0.0
      %724 = vmatpush2.msra.mxu0 0.0
      %725 = vmatprep.subr.mxu0 0.0
      %726 = vmatpush2.msra.mxu0 0.0
      %727 = vmatprep.subr.mxu0 0.0
      %728 = vmatpush2.msra.mxu0 0.0
      %729 = vmatprep.subr.mxu0 0.0
      %730 = vmatpush2.msra.mxu0 0.0
      %731 = vmatprep.subr.mxu0 0.0
      %732 = vmatpush2.msra.mxu0 0.0
      %733 = vmatprep.subr.mxu0 0.0
      %734 = vmatpush2.msra.mxu0 0.0
      %735 = vmatprep.subr.mxu0 0.0
      %736 = vmatpush2.msra.mxu0 0.0
      %737 = vmatprep.mubr.f32.mxu0 0.0
      %738 = vmatmul.mubr.f32.gmra.mxu0 %v668
      %v739 = vpop.f32.mrf.mxu0
      %v740 = vadd.f32 %v659, %v739
      %v741 = vpop.f32.mrf.mxu0
      %v742 = vadd.f32 %v659, %v741
      %743 = vmatprep.mubr.f32.mxu0 0.0
      %744 = vmatmul.mubr.f32.gmra.mxu0 %v671
      %v745 = vpop.f32.mrf.mxu0
      %v746 = vadd.f32 %v664, %v745
      %v747 = vpop.f32.mrf.mxu0
      %v748 = vadd.f32 %v664, %v747
      %749 = vdwg.mxu0
      %v750 = vmax.f32 %v740, 0.0
      %v751 = vmax.f32 %v742, 0.0
      %v752 = vmax.f32 %v746, 0.0
      %v753 = vmax.f32 %v748, 0.0
      %754 = vst [vmem:[%s332 + $0x20] sm:$0xff] %v750
      %755 = vst [vmem:[%s332 + $0x28] sm:$0xff] %v751
      %756 = vst [vmem:[%s332 + $0x30] sm:$0xff] %v752
      %757 = vst [vmem:[%s332 + $0x38] sm:$0xff] %v753
      %760 = vrot.lane.b32.xlu0 %v477, 34
      %v761 = vpop.permute.xlu0 %760
      %762 = vrot.lane.b32.xlu0 %v478, 34
      %v763 = vpop.permute.xlu0 %762
      %vm764 = vcmask 277504
      %v765 = vsel %vm764, %v761, %v763
      %v769 = vsel %vm764, 0.0, %v761
      %v770 = vsel %vm764, %v763, 0.0
      %v771 = vadd.s32 %v521, 4294967294
      %v772 = vadd.s32 %v522, 4294967294
      %vm773 = vcmp.ge.s32.totalorder %v771, 0
      %vm774 = vcmp.ge.s32.totalorder %v772, 0
      %vm775 = vcmp.lt.s32.totalorder %v771, 16
      %vm776 = vcmp.lt.s32.totalorder %v772, 16
      %vm777 = vmand %vm773, %vm775
      %vm778 = vmand %vm774, %vm776
      %v779 = vsel %vm777, 1, 0
      %v780 = vsel %vm778, 1, 0
      %vm781 = vcmp.eq.s32.totalorder %v779, 1
      %vm782 = vcmp.eq.s32.totalorder %v780, 1
      %v783 = vsel %vm781, %v769, 0.0
      %v784 = vsel %vm782, %v765, 0.0
      %787 = vrot.lane.b32.xlu0 %v769, 127
      %v788 = vpop.permute.xlu0 %787
      %789 = vrot.lane.b32.xlu0 %v765, 127
      %v790 = vpop.permute.xlu0 %789
      %791 = vrot.lane.b32.xlu0 %v770, 127
      %v792 = vpop.permute.xlu0 %791
      %v793 = vsel %vm555, %v788, %v790
      %v794 = vsel %vm555, %v790, %v792
      %v797 = vsel %vm533, %v793, 0.0
      %v798 = vsel %vm534, %v794, 0.0
      %799 = vrot.lane.b32.xlu0 %v769, 126
      %v800 = vpop.permute.xlu0 %799
      %801 = vrot.lane.b32.xlu0 %v765, 126
      %v802 = vpop.permute.xlu0 %801
      %803 = vrot.lane.b32.xlu0 %v770, 126
      %v804 = vpop.permute.xlu0 %803
      %v805 = vsel %vm580, %v800, %v802
      %v806 = vsel %vm580, %v802, %v804
      %v809 = vsel %vm545, %v805, 0.0
      %v810 = vsel %vm546, %v806, 0.0
      %811 = vrot.lane.b32.xlu0 %v769, 125
      %v812 = vpop.permute.xlu0 %811
      %813 = vrot.lane.b32.xlu0 %v765, 125
      %v814 = vpop.permute.xlu0 %813
      %815 = vrot.lane.b32.xlu0 %v770, 125
      %v816 = vpop.permute.xlu0 %815
      %vm817 = vcmask 1022976
      %v818 = vsel %vm817, %v812, %v814
      %v819 = vsel %vm817, %v814, %v816
      %v822 = vsel %vm572, %v818, 0.0
      %v823 = vsel %vm573, %v819, 0.0
      %v824 = vadd.s32 %v521, 2
      %v825 = vadd.s32 %v522, 2
      %vm826 = vcmp.ge.s32.totalorder %v824, 0
      %vm827 = vcmp.ge.s32.totalorder %v825, 0
      %vm828 = vcmp.lt.s32.totalorder %v824, 16
      %vm829 = vcmp.lt.s32.totalorder %v825, 16
      %vm830 = vmand %vm826, %vm828
      %vm831 = vmand %vm827, %vm829
      %v832 = vsel %vm830, 1, 0
      %v833 = vsel %vm831, 1, 0
      %vm834 = vcmp.eq.s32.totalorder %v832, 1
      %vm835 = vcmp.eq.s32.totalorder %v833, 1
      %836 = vrot.lane.b32.xlu0 %v769, 124
      %v837 = vpop.permute.xlu0 %836
      %838 = vrot.lane.b32.xlu0 %v765, 124
      %v839 = vpop.permute.xlu0 %838
      %840 = vrot.lane.b32.xlu0 %v770, 124
      %v841 = vpop.permute.xlu0 %840
      %vm842 = vcmask 1014784
      %v843 = vsel %vm842, %v837, %v839
      %v844 = vsel %vm842, %v839, %v841
      %v847 = vsel %vm834, %v843, 0.0
      %v848 = vsel %vm835, %v844, 0.0
      %849 = vrot.lane.b32.xlu0 %v769, 112
      %v850 = vpop.permute.xlu0 %849
      %851 = vrot.lane.b32.xlu0 %v765, 112
      %v852 = vpop.permute.xlu0 %851
      %853 = vrot.lane.b32.xlu0 %v770, 112
      %v854 = vpop.permute.xlu0 %853
      %v855 = vsel %vm593, %v850, %v852
      %v856 = vsel %vm593, %v852, %v854
      %v859 = vsel %vm781, %v855, 0.0
      %v860 = vsel %vm782, %v856, 0.0
      %861 = vrot.lane.b32.xlu0 %v769, 111
      %v862 = vpop.permute.xlu0 %861
      %863 = vrot.lane.b32.xlu0 %v765, 111
      %v864 = vpop.permute.xlu0 %863
      %865 = vrot.lane.b32.xlu0 %v770, 111
      %v866 = vpop.permute.xlu0 %865
      %vm867 = vcmask 908288
      %v868 = vsel %vm867, %v862, %v864
      %v869 = vsel %vm867, %v864, %v866
      %v872 = vsel %vm533, %v868, 0.0
      %v873 = vsel %vm534, %v869, 0.0
      %874 = vrot.lane.b32.xlu0 %v769, 110
      %v875 = vpop.permute.xlu0 %874
      %876 = vrot.lane.b32.xlu0 %v765, 110
      %v877 = vpop.permute.xlu0 %876
      %878 = vrot.lane.b32.xlu0 %v770, 110
      %v879 = vpop.permute.xlu0 %878
      %v880 = vsel %vm606, %v875, %v877
      %v881 = vsel %vm606, %v877, %v879
      %v884 = vsel %vm545, %v880, 0.0
      %v885 = vsel %vm546, %v881, 0.0
      %886 = vrot.lane.b32.xlu0 %v769, 109
      %v887 = vpop.permute.xlu0 %886
      %888 = vrot.lane.b32.xlu0 %v765, 109
      %v889 = vpop.permute.xlu0 %888
      %890 = vrot.lane.b32.xlu0 %v770, 109
      %v891 = vpop.permute.xlu0 %890
      %vm892 = vcmask 891904
      %v893 = vsel %vm892, %v887, %v889
      %v894 = vsel %vm892, %v889, %v891
      %v897 = vsel %vm572, %v893, 0.0
      %v898 = vsel %vm573, %v894, 0.0
      %899 = vrot.lane.b32.xlu0 %v769, 108
      %v900 = vpop.permute.xlu0 %899
      %901 = vrot.lane.b32.xlu0 %v765, 108
      %v902 = vpop.permute.xlu0 %901
      %903 = vrot.lane.b32.xlu0 %v770, 108
      %v904 = vpop.permute.xlu0 %903
      %vm905 = vcmask 883712
      %v906 = vsel %vm905, %v900, %v902
      %v907 = vsel %vm905, %v902, %v904
      %v910 = vsel %vm834, %v906, 0.0
      %v911 = vsel %vm835, %v907, 0.0
      %912 = vrot.lane.b32.xlu0 %v769, 96
      %v913 = vpop.permute.xlu0 %912
      %914 = vrot.lane.b32.xlu0 %v765, 96
      %v915 = vpop.permute.xlu0 %914
      %916 = vrot.lane.b32.xlu0 %v770, 96
      %v917 = vpop.permute.xlu0 %916
      %v918 = vsel %vm619, %v913, %v915
      %v919 = vsel %vm619, %v915, %v917
      %v922 = vsel %vm781, %v918, 0.0
      %v923 = vsel %vm782, %v919, 0.0
      %924 = vrot.lane.b32.xlu0 %v769, 95
      %v925 = vpop.permute.xlu0 %924
      %926 = vrot.lane.b32.xlu0 %v765, 95
      %v927 = vpop.permute.xlu0 %926
      %928 = vrot.lane.b32.xlu0 %v770, 95
      %v929 = vpop.permute.xlu0 %928
      %v930 = vsel %vm632, %v925, %v927
      %v931 = vsel %vm632, %v927, %v929
      %v934 = vsel %vm533, %v930, 0.0
      %v935 = vsel %vm534, %v931, 0.0
      %936 = vrot.lane.b32.xlu0 %v769, 93
      %v937 = vpop.permute.xlu0 %936
      %938 = vrot.lane.b32.xlu0 %v765, 93
      %v939 = vpop.permute.xlu0 %938
      %940 = vrot.lane.b32.xlu0 %v770, 93
      %v941 = vpop.permute.xlu0 %940
      %vm942 = vcmask 760832
      %v943 = vsel %vm942, %v937, %v939
      %v944 = vsel %vm942, %v939, %v941
      %v947 = vsel %vm572, %v943, 0.0
      %v948 = vsel %vm573, %v944, 0.0
      %949 = vrot.lane.b32.xlu0 %v769, 92
      %v950 = vpop.permute.xlu0 %949
      %951 = vrot.lane.b32.xlu0 %v765, 92
      %v952 = vpop.permute.xlu0 %951
      %953 = vrot.lane.b32.xlu0 %v770, 92
      %v954 = vpop.permute.xlu0 %953
      %vm955 = vcmask 752640
      %v956 = vsel %vm955, %v950, %v952
      %v957 = vsel %vm955, %v952, %v954
      %v960 = vsel %vm834, %v956, 0.0
      %v961 = vsel %vm835, %v957, 0.0
      %962 = vrot.lane.b32.xlu0 %v769, 80
      %v963 = vpop.permute.xlu0 %962
      %964 = vrot.lane.b32.xlu0 %v765, 80
      %v965 = vpop.permute.xlu0 %964
      %966 = vrot.lane.b32.xlu0 %v770, 80
      %v967 = vpop.permute.xlu0 %966
      %vm968 = vcmask 654336
      %v969 = vsel %vm968, %v963, %v965
      %v970 = vsel %vm968, %v965, %v967
      %v973 = vsel %vm781, %v969, 0.0
      %v974 = vsel %vm782, %v970, 0.0
      %975 = vrot.lane.b32.xlu0 %v769, 79
      %v976 = vpop.permute.xlu0 %975
      %977 = vrot.lane.b32.xlu0 %v765, 79
      %v978 = vpop.permute.xlu0 %977
      %979 = vrot.lane.b32.xlu0 %v770, 79
      %v980 = vpop.permute.xlu0 %979
      %vm981 = vcmask 646144
      %v982 = vsel %vm981, %v976, %v978
      %v983 = vsel %vm981, %v978, %v980
      %v986 = vsel %vm533, %v982, 0.0
      %v987 = vsel %vm534, %v983, 0.0
      %988 = vrot.lane.b32.xlu0 %v769, 78
      %v989 = vpop.permute.xlu0 %988
      %990 = vrot.lane.b32.xlu0 %v765, 78
      %v991 = vpop.permute.xlu0 %990
      %992 = vrot.lane.b32.xlu0 %v770, 78
      %v993 = vpop.permute.xlu0 %992
      %vm994 = vcmask 637952
      %v995 = vsel %vm994, %v989, %v991
      %v996 = vsel %vm994, %v991, %v993
      %v999 = vsel %vm545, %v995, 0.0
      %v1000 = vsel %vm546, %v996, 0.0
      %1001 = vrot.lane.b32.xlu0 %v769, 77
      %v1002 = vpop.permute.xlu0 %1001
      %1003 = vrot.lane.b32.xlu0 %v765, 77
      %v1004 = vpop.permute.xlu0 %1003
      %1005 = vrot.lane.b32.xlu0 %v770, 77
      %v1006 = vpop.permute.xlu0 %1005
      %vm1007 = vcmask 629760
      %v1008 = vsel %vm1007, %v1002, %v1004
      %v1009 = vsel %vm1007, %v1004, %v1006
      %v1012 = vsel %vm572, %v1008, 0.0
      %v1013 = vsel %vm573, %v1009, 0.0
      %1014 = vrot.lane.b32.xlu0 %v769, 76
      %v1015 = vpop.permute.xlu0 %1014
      %1016 = vrot.lane.b32.xlu0 %v765, 76
      %v1017 = vpop.permute.xlu0 %1016
      %1018 = vrot.lane.b32.xlu0 %v770, 76
      %v1019 = vpop.permute.xlu0 %1018
      %vm1020 = vcmask 621568
      %v1021 = vsel %vm1020, %v1015, %v1017
      %v1022 = vsel %vm1020, %v1017, %v1019
      %v1025 = vsel %vm834, %v1021, 0.0
      %v1026 = vsel %vm835, %v1022, 0.0
      %1027 = vrot.lane.b32.xlu0 %v769, 64
      %v1028 = vpop.permute.xlu0 %1027
      %1029 = vrot.lane.b32.xlu0 %v765, 64
      %v1030 = vpop.permute.xlu0 %1029
      %1031 = vrot.lane.b32.xlu0 %v770, 64
      %v1032 = vpop.permute.xlu0 %1031
      %vm1033 = vcmask 523264
      %v1034 = vsel %vm1033, %v1028, %v1030
      %v1035 = vsel %vm1033, %v1030, %v1032
      %v1038 = vsel %vm781, %v1034, 0.0
      %v1039 = vsel %vm782, %v1035, 0.0
      %1040 = vrot.lane.b32.xlu0 %v769, 63
      %v1041 = vpop.permute.xlu0 %1040
      %1042 = vrot.lane.b32.xlu0 %v765, 63
      %v1043 = vpop.permute.xlu0 %1042
      %1044 = vrot.lane.b32.xlu0 %v770, 63
      %v1045 = vpop.permute.xlu0 %1044
      %vm1046 = vcmask 515072
      %v1047 = vsel %vm1046, %v1041, %v1043
      %v1048 = vsel %vm1046, %v1043, %v1045
      %v1051 = vsel %vm533, %v1047, 0.0
      %v1052 = vsel %vm534, %v1048, 0.0
      %1053 = vrot.lane.b32.xlu0 %v769, 62
      %v1054 = vpop.permute.xlu0 %1053
      %1055 = vrot.lane.b32.xlu0 %v765, 62
      %v1056 = vpop.permute.xlu0 %1055
      %1057 = vrot.lane.b32.xlu0 %v770, 62
      %v1058 = vpop.permute.xlu0 %1057
      %vm1059 = vcmask 506880
      %v1060 = vsel %vm1059, %v1054, %v1056
      %v1061 = vsel %vm1059, %v1056, %v1058
      %v1064 = vsel %vm545, %v1060, 0.0
      %v1065 = vsel %vm546, %v1061, 0.0
      %1066 = vrot.lane.b32.xlu0 %v769, 61
      %v1067 = vpop.permute.xlu0 %1066
      %1068 = vrot.lane.b32.xlu0 %v765, 61
      %v1069 = vpop.permute.xlu0 %1068
      %1070 = vrot.lane.b32.xlu0 %v770, 61
      %v1071 = vpop.permute.xlu0 %1070
      %vm1072 = vcmask 498688
      %v1073 = vsel %vm1072, %v1067, %v1069
      %v1074 = vsel %vm1072, %v1069, %v1071
      %v1077 = vsel %vm572, %v1073, 0.0
      %v1078 = vsel %vm573, %v1074, 0.0
      %1079 = vrot.lane.b32.xlu0 %v769, 60
      %v1080 = vpop.permute.xlu0 %1079
      %1081 = vrot.lane.b32.xlu0 %v765, 60
      %v1082 = vpop.permute.xlu0 %1081
      %1083 = vrot.lane.b32.xlu0 %v770, 60
      %v1084 = vpop.permute.xlu0 %1083
      %vm1085 = vcmask 490496
      %v1086 = vsel %vm1085, %v1080, %v1082
      %v1087 = vsel %vm1085, %v1082, %v1084
      %v1090 = vsel %vm834, %v1086, 0.0
      %v1091 = vsel %vm835, %v1087, 0.0
      %v1094 = vrot.slane %v797, 4
      %v1095 = vrot.slane %v798, 4
      %v1100 = vrot.slane %v822, 4
      %v1101 = vrot.slane %v823, 4
      %v1106 = vrot.slane %v859, 4
      %v1107 = vrot.slane %v860, 4
      %v1112 = vrot.slane %v884, 4
      %v1113 = vrot.slane %v885, 4
      %v1118 = vrot.slane %v910, 4
      %v1119 = vrot.slane %v911, 4
      %v1124 = vrot.slane %v934, 4
      %v1125 = vrot.slane %v935, 4
      %v1130 = vrot.slane %v947, 4
      %v1131 = vrot.slane %v948, 4
      %v1136 = vrot.slane %v973, 4
      %v1137 = vrot.slane %v974, 4
      %v1140 = vsel %vm377, %v783, %v1094
      %v1141 = vsel %vm377, %v784, %v1095
      %v1142 = vsel %vm377, %v809, %v1100
      %v1143 = vsel %vm377, %v810, %v1101
      %v1144 = vsel %vm377, %v847, %v1106
      %v1145 = vsel %vm377, %v848, %v1107
      %v1146 = vsel %vm377, %v872, %v1112
      %v1147 = vsel %vm377, %v873, %v1113
      %v1148 = vsel %vm377, %v897, %v1118
      %v1149 = vsel %vm377, %v898, %v1119
      %v1150 = vsel %vm377, %v922, %v1124
      %v1151 = vsel %vm377, %v923, %v1125
      %v1152 = vsel %vm377, %v477, %v1130
      %v1153 = vsel %vm377, %v478, %v1131
      %v1154 = vsel %vm377, %v960, %v1136
      %v1155 = vsel %vm377, %v961, %v1137
      %v1158 = vrot.slane %v999, 4
      %v1159 = vrot.slane %v1000, 4
      %v1164 = vrot.slane %v1025, 4
      %v1165 = vrot.slane %v1026, 4
      %v1170 = vrot.slane %v1051, 4
      %v1171 = vrot.slane %v1052, 4
      %v1176 = vrot.slane %v1077, 4
      %v1177 = vrot.slane %v1078, 4
      %v1180 = vsel %vm377, %v986, %v1158
      %v1181 = vsel %vm377, %v987, %v1159
      %v1182 = vsel %vm377, %v1012, %v1164
      %v1183 = vsel %vm377, %v1013, %v1165
      %v1184 = vsel %vm377, %v1038, %v1170
      %v1185 = vsel %vm377, %v1039, %v1171
      %v1186 = vsel %vm377, %v1064, %v1176
      %v1187 = vsel %vm377, %v1065, %v1177
      %v1188 = vld [vmem:[%s5] sm:$0xff]
      %v1189 = vld [vmem:[%s6] sm:$0xff]
      %1191 = vset.pattern.permute.xlu0 0
      %1192 = vperm.xlu0 %1191, %v1189
      %v1193 = vpop.permute.xlu0 %1192
      %vm1195 = vcmask 818176
      %v1197 = vsel %vm1195, %v1188, 0
      %v1200 = vsel %vm377, %v1090, 0
      %v1203 = vsel %vm377, %v1091, 0
      %1205 = vmatprep.subr.mxu0 0.0
      %1206 = vmatpush1.msra.mxu0 0.0
      %1207 = vmatprep.subr.mxu0 0.0
      %1208 = vmatpush1.msra.mxu0 0.0
      %1209 = vmatprep.subr.mxu0 0.0
      %1210 = vmatpush1.msra.mxu0 0.0
      %1211 = vmatprep.subr.mxu0 %v1203
      %1212 = vmatpush1.msra.mxu0 %v1200
      %1213 = vmatprep.subr.mxu0 %v1187
      %1214 = vmatpush1.msra.mxu0 %v1186
      %1215 = vmatprep.subr.mxu0 %v1185
      %1216 = vmatpush1.msra.mxu0 %v1184
      %1217 = vmatprep.subr.mxu0 %v1183
      %1218 = vmatpush1.msra.mxu0 %v1182
      %1219 = vmatprep.subr.mxu0 %v1181
      %1220 = vmatpush1.msra.mxu0 %v1180
      %1221 = vmatprep.subr.mxu0 %v1155
      %1222 = vmatpush1.msra.mxu0 %v1154
      %1223 = vmatprep.subr.mxu0 %v1153
      %1224 = vmatpush1.msra.mxu0 %v1152
      %1225 = vmatprep.subr.mxu0 %v1151
      %1226 = vmatpush1.msra.mxu0 %v1150
      %1227 = vmatprep.subr.mxu0 %v1149
      %1228 = vmatpush1.msra.mxu0 %v1148
      %1229 = vmatprep.subr.mxu0 %v1147
      %1230 = vmatpush1.msra.mxu0 %v1146
      %1231 = vmatprep.subr.mxu0 %v1145
      %1232 = vmatpush1.msra.mxu0 %v1144
      %1233 = vmatprep.subr.mxu0 %v1143
      %1234 = vmatpush1.msra.mxu0 %v1142
      %1235 = vmatprep.subr.mxu0 %v1141
      %1236 = vmatpush1.msra.mxu0 %v1140
      %1237 = vmatprep.subr.mxu0 0.0
      %1238 = vmatpush2.msra.mxu0 0.0
      %1239 = vmatprep.subr.mxu0 0.0
      %1240 = vmatpush2.msra.mxu0 0.0
      %1241 = vmatprep.subr.mxu0 0.0
      %1242 = vmatpush2.msra.mxu0 0.0
      %1243 = vmatprep.subr.mxu0 0.0
      %1244 = vmatpush2.msra.mxu0 0.0
      %1245 = vmatprep.subr.mxu0 0.0
      %1246 = vmatpush2.msra.mxu0 0.0
      %1247 = vmatprep.subr.mxu0 0.0
      %1248 = vmatpush2.msra.mxu0 0.0
      %1249 = vmatprep.subr.mxu0 0.0
      %1250 = vmatpush2.msra.mxu0 0.0
      %1251 = vmatprep.subr.mxu0 0.0
      %1252 = vmatpush2.msra.mxu0 0.0
      %1253 = vmatprep.subr.mxu0 0.0
      %1254 = vmatpush2.msra.mxu0 0.0
      %1255 = vmatprep.subr.mxu0 0.0
      %1256 = vmatpush2.msra.mxu0 0.0
      %1257 = vmatprep.subr.mxu0 0.0
      %1258 = vmatpush2.msra.mxu0 0.0
      %1259 = vmatprep.subr.mxu0 0.0
      %1260 = vmatpush2.msra.mxu0 0.0
      %1261 = vmatprep.subr.mxu0 0.0
      %1262 = vmatpush2.msra.mxu0 0.0
      %1263 = vmatprep.subr.mxu0 0.0
      %1264 = vmatpush2.msra.mxu0 0.0
      %1265 = vmatprep.subr.mxu0 0.0
      %1266 = vmatpush2.msra.mxu0 0.0
      %1267 = vmatprep.subr.mxu0 0.0
      %1268 = vmatpush2.msra.mxu0 0.0
      %1269 = vmatprep.mubr.f32.mxu0 0.0
      %1270 = vmatmul.mubr.f32.gmra.mxu0 %v1197
      %v1271 = vpop.f32.mrf.mxu0
      %v1272 = vadd.f32 %v1193, %v1271
      %v1273 = vpop.f32.mrf.mxu0
      %v1274 = vadd.f32 %v1193, %v1273
      %1275 = vdwg.mxu0
      %v1276 = vmax.f32 %v1272, 0.0
      %v1277 = vmax.f32 %v1274, 0.0
      %1278 = vst [vmem:[%s332 + $0x40] sm:$0xff] %v1276
      %1279 = vst [vmem:[%s332 + $0x48] sm:$0xff] %v1277
      %1280 = vrot.lane.b32.xlu0 %v333, 17
      %v1281 = vpop.permute.xlu0 %1280
      %1282 = vrot.lane.b32.xlu0 %v363, 17
      %v1283 = vpop.permute.xlu0 %1282
      %v1284 = vsel %vm489, %v1281, %v1283
      %v1288 = vsel %vm489, -inf, %v1281
      %v1289 = vsel %vm489, %v1283, -inf
      %v1290 = vsel %vm533, %v1288, -inf
      %v1291 = vsel %vm534, %v1284, -inf
      %1294 = vrot.lane.b32.xlu0 %v1288, 127
      %v1295 = vpop.permute.xlu0 %1294
      %1296 = vrot.lane.b32.xlu0 %v1284, 127
      %v1297 = vpop.permute.xlu0 %1296
      %1298 = vrot.lane.b32.xlu0 %v1289, 127
      %v1299 = vpop.permute.xlu0 %1298
      %v1300 = vsel %vm555, %v1295, %v1297
      %v1301 = vsel %vm555, %v1297, %v1299
      %v1304 = vsel %vm545, %v1300, -inf
      %v1305 = vsel %vm546, %v1301, -inf
      %1306 = vrot.lane.b32.xlu0 %v1288, 126
      %v1307 = vpop.permute.xlu0 %1306
      %1308 = vrot.lane.b32.xlu0 %v1284, 126
      %v1309 = vpop.permute.xlu0 %1308
      %1310 = vrot.lane.b32.xlu0 %v1289, 126
      %v1311 = vpop.permute.xlu0 %1310
      %v1312 = vsel %vm580, %v1307, %v1309
      %v1313 = vsel %vm580, %v1309, %v1311
      %v1316 = vsel %vm572, %v1312, -inf
      %v1317 = vsel %vm573, %v1313, -inf
      %1318 = vrot.lane.b32.xlu0 %v1288, 112
      %v1319 = vpop.permute.xlu0 %1318
      %1320 = vrot.lane.b32.xlu0 %v1284, 112
      %v1321 = vpop.permute.xlu0 %1320
      %1322 = vrot.lane.b32.xlu0 %v1289, 112
      %v1323 = vpop.permute.xlu0 %1322
      %v1324 = vsel %vm593, %v1319, %v1321
      %v1325 = vsel %vm593, %v1321, %v1323
      %v1328 = vsel %vm533, %v1324, -inf
      %v1329 = vsel %vm534, %v1325, -inf
      %1330 = vrot.lane.b32.xlu0 %v1288, 110
      %v1331 = vpop.permute.xlu0 %1330
      %1332 = vrot.lane.b32.xlu0 %v1284, 110
      %v1333 = vpop.permute.xlu0 %1332
      %1334 = vrot.lane.b32.xlu0 %v1289, 110
      %v1335 = vpop.permute.xlu0 %1334
      %v1336 = vsel %vm606, %v1331, %v1333
      %v1337 = vsel %vm606, %v1333, %v1335
      %v1340 = vsel %vm572, %v1336, -inf
      %v1341 = vsel %vm573, %v1337, -inf
      %1342 = vrot.lane.b32.xlu0 %v1288, 96
      %v1343 = vpop.permute.xlu0 %1342
      %1344 = vrot.lane.b32.xlu0 %v1284, 96
      %v1345 = vpop.permute.xlu0 %1344
      %1346 = vrot.lane.b32.xlu0 %v1289, 96
      %v1347 = vpop.permute.xlu0 %1346
      %v1348 = vsel %vm619, %v1343, %v1345
      %v1349 = vsel %vm619, %v1345, %v1347
      %v1352 = vsel %vm533, %v1348, -inf
      %v1353 = vsel %vm534, %v1349, -inf
      %1354 = vrot.lane.b32.xlu0 %v1288, 95
      %v1355 = vpop.permute.xlu0 %1354
      %1356 = vrot.lane.b32.xlu0 %v1284, 95
      %v1357 = vpop.permute.xlu0 %1356
      %1358 = vrot.lane.b32.xlu0 %v1289, 95
      %v1359 = vpop.permute.xlu0 %1358
      %v1360 = vsel %vm632, %v1355, %v1357
      %v1361 = vsel %vm632, %v1357, %v1359
      %v1364 = vsel %vm545, %v1360, -inf
      %v1365 = vsel %vm546, %v1361, -inf
      %1366 = vrot.lane.b32.xlu0 %v1288, 94
      %v1367 = vpop.permute.xlu0 %1366
      %1368 = vrot.lane.b32.xlu0 %v1284, 94
      %v1369 = vpop.permute.xlu0 %1368
      %1370 = vrot.lane.b32.xlu0 %v1289, 94
      %v1371 = vpop.permute.xlu0 %1370
      %v1372 = vsel %vm645, %v1367, %v1369
      %v1373 = vsel %vm645, %v1369, %v1371
      %v1376 = vsel %vm572, %v1372, -inf
      %v1377 = vsel %vm573, %v1373, -inf
      %v1378 = vmax.f32 %v1290, %v1304
      %v1379 = vmax.f32 %v1291, %v1305
      %v1380 = vmax.f32 %v1378, %v1316
      %v1381 = vmax.f32 %v1379, %v1317
      %v1382 = vmax.f32 %v1380, %v1328
      %v1383 = vmax.f32 %v1381, %v1329
      %v1385 = vmax.f32 %v1382, %v333
      %v1386 = vmax.f32 %v1383, %v363
      %v1387 = vmax.f32 %v1385, %v1340
      %v1388 = vmax.f32 %v1386, %v1341
      %v1389 = vmax.f32 %v1387, %v1352
      %v1390 = vmax.f32 %v1388, %v1353
      %v1391 = vmax.f32 %v1389, %v1364
      %v1392 = vmax.f32 %v1390, %v1365
      %v1393 = vmax.f32 %v1391, %v1376
      %v1394 = vmax.f32 %v1392, %v1377
      %v1395 = vld [vmem:[%s7] sm:$0xff]
      %v1396 = vld [vmem:[%s8] sm:$0xff]
      %1398 = vset.pattern.permute.xlu0 0
      %1399 = vperm.xlu0 %1398, %v1396
      %v1400 = vpop.permute.xlu0 %1399
      %v1403 = vsel %vm364, %v1395, 0
      %v1406 = vsel %vm377, %v1393, 0
      %v1409 = vsel %vm377, %v1394, 0
      %1411 = vmatprep.subr.mxu0 0.0
      %1412 = vmatpush1.msra.mxu0 0.0
      %1413 = vmatprep.subr.mxu0 0.0
      %1414 = vmatpush1.msra.mxu0 0.0
      %1415 = vmatprep.subr.mxu0 0.0
      %1416 = vmatpush1.msra.mxu0 0.0
      %1417 = vmatprep.subr.mxu0 0.0
      %1418 = vmatpush1.msra.mxu0 0.0
      %1419 = vmatprep.subr.mxu0 0.0
      %1420 = vmatpush1.msra.mxu0 0.0
      %1421 = vmatprep.subr.mxu0 0.0
      %1422 = vmatpush1.msra.mxu0 0.0
      %1423 = vmatprep.subr.mxu0 0.0
      %1424 = vmatpush1.msra.mxu0 0.0
      %1425 = vmatprep.subr.mxu0 0.0
      %1426 = vmatpush1.msra.mxu0 0.0
      %1427 = vmatprep.subr.mxu0 0.0
      %1428 = vmatpush1.msra.mxu0 0.0
      %1429 = vmatprep.subr.mxu0 0.0
      %1430 = vmatpush1.msra.mxu0 0.0
      %1431 = vmatprep.subr.mxu0 0.0
      %1432 = vmatpush1.msra.mxu0 0.0
      %1433 = vmatprep.subr.mxu0 0.0
      %1434 = vmatpush1.msra.mxu0 0.0
      %1435 = vmatprep.subr.mxu0 0.0
      %1436 = vmatpush1.msra.mxu0 0.0
      %1437 = vmatprep.subr.mxu0 0.0
      %1438 = vmatpush1.msra.mxu0 0.0
      %1439 = vmatprep.subr.mxu0 0.0
      %1440 = vmatpush1.msra.mxu0 0.0
      %1441 = vmatprep.subr.mxu0 %v1409
      %1442 = vmatpush1.msra.mxu0 %v1406
      %1443 = vmatprep.subr.mxu0 0.0
      %1444 = vmatpush2.msra.mxu0 0.0
      %1445 = vmatprep.subr.mxu0 0.0
      %1446 = vmatpush2.msra.mxu0 0.0
      %1447 = vmatprep.subr.mxu0 0.0
      %1448 = vmatpush2.msra.mxu0 0.0
      %1449 = vmatprep.subr.mxu0 0.0
      %1450 = vmatpush2.msra.mxu0 0.0
      %1451 = vmatprep.subr.mxu0 0.0
      %1452 = vmatpush2.msra.mxu0 0.0
      %1453 = vmatprep.subr.mxu0 0.0
      %1454 = vmatpush2.msra.mxu0 0.0
      %1455 = vmatprep.subr.mxu0 0.0
      %1456 = vmatpush2.msra.mxu0 0.0
      %1457 = vmatprep.subr.mxu0 0.0
      %1458 = vmatpush2.msra.mxu0 0.0
      %1459 = vmatprep.subr.mxu0 0.0
      %1460 = vmatpush2.msra.mxu0 0.0
      %1461 = vmatprep.subr.mxu0 0.0
      %1462 = vmatpush2.msra.mxu0 0.0
      %1463 = vmatprep.subr.mxu0 0.0
      %1464 = vmatpush2.msra.mxu0 0.0
      %1465 = vmatprep.subr.mxu0 0.0
      %1466 = vmatpush2.msra.mxu0 0.0
      %1467 = vmatprep.subr.mxu0 0.0
      %1468 = vmatpush2.msra.mxu0 0.0
      %1469 = vmatprep.subr.mxu0 0.0
      %1470 = vmatpush2.msra.mxu0 0.0
      %1471 = vmatprep.subr.mxu0 0.0
      %1472 = vmatpush2.msra.mxu0 0.0
      %1473 = vmatprep.subr.mxu0 0.0
      %1474 = vmatpush2.msra.mxu0 0.0
      %1475 = vmatprep.mubr.f32.mxu0 0.0
      %1476 = vmatmul.mubr.f32.gmra.mxu0 %v1403
      %v1477 = vpop.f32.mrf.mxu0
      %v1478 = vadd.f32 %v1400, %v1477
      %v1479 = vpop.f32.mrf.mxu0
      %v1480 = vadd.f32 %v1400, %v1479
      %1481 = vdwg.mxu0
      %v1482 = vmax.f32 %v1478, 0.0
      %v1483 = vmax.f32 %v1480, 0.0
      %1484 = vst [vmem:[%s332 + $0x50] sm:$0xff] %v1482
      %1485 = vst [vmem:[%s332 + $0x58] sm:$0xff] %v1483
      %p1486 = scmp.lt.s32.totalorder %s20, 1
      %s1487 = scalar_select %p1486, %s20, 1
      %s1488 = smul.addr %s1487, 12
      %s1489 = smul.addr %s1488, 8
      %s1490 = scalar_lea.vmem %s9, %s1489
      // Predicated region
      $region57: #{inception_forward.1} parent=55 // pred_check
        %p1491 = pneg %p232
      $region58: #{inception_forward.1} parent=55 // pred_check_branch
        %1493 = sbr.rel (%p1491) target = $region60
      $region59: #{inception_forward.1} parent=55 // pred_region
        _
      $region60: #{inception_forward.1} parent=55 // pred_fallthru
        _
    $region56: #{inception_forward.1} parent=5 // pred_fallthru
      _
    %p1494 = scmp.le.s32.totalorder 2, %s15
    // Predicated region
    $region61: #{inception_forward.1} parent=5 // pred_check
      %p1495 = pneg %p1494
    $region62: #{inception_forward.1} parent=5 // pred_check_branch
      %1497 = sbr.rel (%p1495) target = $region64
    $region63: #{inception_forward.1} parent=5 // pred_region
      %s1498 = ssub.s32 %s15, 2
      // Predicated region
      $region65: #{inception_forward.1} parent=63 // pred_check
        %p1499 = pneg %p238
      $region66: #{inception_forward.1} parent=63 // pred_check_branch
        %1501 = sbr.rel (%p1499) target = $region68
      $region67: #{inception_forward.1} parent=63 // pred_region
        %p1502 = scmp.lt.s32.totalorder %s21, 1
        %s1503 = scalar_select %p1502, %s21, 1
        %s1504 = smul.addr %s1503, 12
        %s1505 = smul.addr %s1504, 8
        %s1506 = scalar_lea.vmem %s9, %s1505
      $region68: #{inception_forward.1} parent=63 // pred_fallthru
        _
    $region64: #{inception_forward.1} parent=5 // pred_fallthru
      _
  $region6: #{inception_forward.1} parent=0 // loop_footer
    %s19 = sadd.s32 1, %s15
  $region7: #{inception_forward.1} parent=0 // loop_footer_branch
    %14 = sbr.rel target = $region3
  $region8: #{inception_forward.1} parent=0 // loop_exit
    _

</llo_original>
